<compile_context>
chip_gen: v5e
topology: v5e:2x2
jax: 0.10.0
libtpu: 0.0.40
codegen_flags: <defaults>
</compile_context>

<pallas_src>
import jax
import jax.numpy as jnp
from jax.experimental import pallas as pl
from jax.experimental.pallas import tpu as pltpu

EPS = 1e-5        # torch.nn.GroupNorm default eps
_MAX_BT = 16      # cap on batch rows per grid step (static-unroll sanity)


# ----------------------------------------------------------------------------
# Hardware-aware sizing helpers
# ----------------------------------------------------------------------------
def _vmem_capacity_bytes():
    try:
        return int(pltpu.get_tpu_info().vmem_capacity_bytes)
    except Exception:
        return 64 * 1024 * 1024          # conservative default (v7x per-TC)


def _multi_tensorcore():
    """Best-effort: does this chip have >1 TensorCore sharing the grid?"""
    try:
        kind = jax.devices()[0].device_kind.lower()
    except Exception:
        return False
    return ('v7' in kind) or ('v4' in kind) or ('v5p' in kind)


# ----------------------------------------------------------------------------
# Kernel factory (closes over static tile sizes)
# ----------------------------------------------------------------------------
def _make_kernel(nb, bt, c, hw):
    f32 = jnp.float32
    inv_hw = 1.0 / float(hw)

    def kernel(x_ref, w1x_ref, w1t_ref, b1_ref,
               da1t_ref, ba1_ref, g1w_ref, g1b_ref,
               da2t_ref, ba2_ref, g2w_ref, g2b_ref,
               wf1t_ref, bf1_ref, wf2t_ref, bf2_ref,
               out_ref):
        # ---- global avg / max pooling over spatial (no f32 slab copy) --------
        avg_x = jnp.sum(x_ref[...], axis=-1, dtype=f32) * inv_hw      # (bt, c)
        max_x = jnp.max(x_ref[...], axis=-1).astype(f32)              # (bt, c)

        # ---- conv1 (1x1) pooled: avg analytically; max needs the (nb, hw) map -
        b1 = b1_ref[...]                                               # (1, nb)
        d_avg = jnp.dot(avg_x, w1t_ref[...],
                        preferred_element_type=f32) + b1               # (bt, nb)
        w1x = w1x_ref[...]                                             # (nb, c), x dtype
        dmax_rows = []
        for b in range(bt):                                            # static, small
            db = jnp.dot(w1x, x_ref[b], preferred_element_type=f32)    # (nb, hw)
            dmax_rows.append(jnp.max(db, axis=-1, keepdims=True).T)    # (1, nb)
        d_max = jnp.concatenate(dmax_rows, axis=0) + b1                # (bt, nb)

        # ---- domain attention: fc1 -> relu -> fc2 -> softmax ------------------
        wf1t = wf1t_ref[...]; bf1 = bf1_ref[...]
        wf2t = wf2t_ref[...]; bf2 = bf2_ref[...]

        def fc_softmax(d):                                             # (bt, nb)
            z = jnp.dot(d, wf1t, preferred_element_type=f32) + bf1
            z = jnp.maximum(z, 0.0)
            z = jnp.dot(z, wf2t, preferred_element_type=f32) + bf2
            z = z - jnp.max(z, axis=-1, keepdims=True)
            ez = jnp.exp(z)
            return ez / jnp.sum(ez, axis=-1, keepdims=True)

        s_sum = fc_softmax(d_avg) + fc_softmax(d_max)                  # (bt, nb)

        # ---- SE / channel-recalibration path, per group -----------------------
        ba1 = ba1_ref[...]; g1w = g1w_ref[...]; g1b = g1b_ref[...]
        ba2 = ba2_ref[...]; g2w = g2w_ref[...]; g2b = g2b_ref[...]

        def se_group(pooled, g):                                       # (bt, c) -> (bt, c)
            # domain_adaptor1 group g (input = pooled vector, same for all groups)
            h = jnp.dot(pooled, da1t_ref[g],
                        preferred_element_type=f32) + ba1[g:g + 1, :]
            # domain_norm1 group g: biased variance over cs lanes
            m = jnp.mean(h, axis=-1, keepdims=True)
            hc = h - m
            v = jnp.mean(hc * hc, axis=-1, keepdims=True)
            h = hc * jax.lax.rsqrt(v + EPS) * g1w[g:g + 1, :] + g1b[g:g + 1, :]
            h = jnp.maximum(h, 0.0)                                    # relu
            # domain_adaptor2 group g (grouped conv -> per-group (cs, c) matmul)
            h2 = jnp.dot(h, da2t_ref[g],
                         preferred_element_type=f32) + ba2[g:g + 1, :]
            # domain_norm2 group g: biased variance over c lanes
            m2 = jnp.mean(h2, axis=-1, keepdims=True)
            h2c = h2 - m2
            v2 = jnp.mean(h2c * h2c, axis=-1, keepdims=True)
            h2 = h2c * jax.lax.rsqrt(v2 + EPS) * g2w[g:g + 1, :] + g2b[g:g + 1, :]
            return jax.nn.sigmoid(h2)

        att = jnp.zeros((bt, c), dtype=f32)
        for g in range(nb):                                            # static, nb is small
            r = se_group(avg_x, g) + se_group(max_x, g)                # (bt, c)
            att = att + r * s_sum[:, g:g + 1]

        # ---- apply: x * (sigmoid(att) + 1) in the input dtype ------------------
        scale = (jax.nn.sigmoid(att) + 1.0)[:, :, None].astype(out_ref.dtype)
        out_ref[...] = x_ref[...] * scale

    return kernel


# ----------------------------------------------------------------------------
# Wrapper: parameter plumbing + pallas_call
# ----------------------------------------------------------------------------
def gen_adapt_se_block(x, params, num_block, shrink):
    B, C, H, W = x.shape
    nb = num_block
    cs = C // shrink
    HW = H * W
    f32 = jnp.float32

    # --- generation-aware VMEM budget and batch-tile selection ---------------
    cap = _vmem_capacity_bytes()
    vmem_limit = min(int(0.75 * cap), 100 * 1024 * 1024)
    slab_b = C * HW * x.dtype.itemsize
    # per-step live set ~= 2x(in) + 2x(out) double-buffered slabs + ~1 slab of
    # in-kernel temps / store staging headroom
    bt_budget = max(1, int(0.6 * cap) // (5 * slab_b))
    bt_cap = min(bt_budget, _MAX_BT, B)
    if _multi_tensorcore() and B >= 2:
        bt_cap = min(bt_cap, max(1, B // 2))      # keep grid >= 2 for megacore
    bt = 1
    for d in range(1, bt_cap + 1):                # largest divisor of B (no pad / tail)
        if B % d == 0:
            bt = d

    # TODO(synk): for slabs too large even at bt=1 (e.g. planes=16 / size=384 in
    # f32 on v7x's 64 MiB), a two-pass HW-tiled pipeline (reduce then apply) is
    # needed; likewise a second parallel HW-tile axis would keep both v7x cores
    # busy at B == 1.

    x2 = x.reshape(B, C, HW)                      # metadata-only; no HBM pad/slice

    # --- parameters (tiny; f32 math, pre-transposed / per-group shaped) ------
    w1 = params['conv1_w'][:, :, 0, 0]
    consts = [
        w1.astype(x.dtype),                                           # (nb, C)  d_max MXU
        w1.astype(f32).T,                                             # (C, nb)  analytic d_avg
        params['conv1_b'].astype(f32)[None, :],                       # (1, nb)
        params['da1_w'][:, :, 0, 0].astype(f32).reshape(nb, cs, C).transpose(0, 2, 1),  # (nb, C, cs)
        params['da1_b'].astype(f32).reshape(nb, cs),                  # (nb, cs)
        params['gn1_w'].astype(f32).reshape(nb, cs),                  # (nb, cs)
        params['gn1_b'].astype(f32).reshape(nb, cs),                  # (nb, cs)
        params['da2_w'][:, :, 0, 0].astype(f32).reshape(nb, C, cs).transpose(0, 2, 1),  # (nb, cs, C)
        params['da2_b'].astype(f32).reshape(nb, C),                   # (nb, C)
        params['gn2_w'].astype(f32).reshape(nb, C),                   # (nb, C)
        params['gn2_b'].astype(f32).reshape(nb, C),                   # (nb, C)
        params['fc1_w'].astype(f32).T,                                # (nb, nb2)
        params['fc1_b'].astype(f32)[None, :],                         # (1, nb2)
        params['fc2_w'].astype(f32).T,                                # (nb2, nb)
        params['fc2_b'].astype(f32)[None, :],                         # (1, nb)
    ]
    # (Further packing of these 15 tiny constants into one flat buffer is a
    #  minor per-step-overhead win; skipped since the grid here is very short.)

    def _full_spec(a):
        return pl.BlockSpec(a.shape, lambda i, _nd=a.ndim: (0,) * _nd)

    in_specs = [pl.BlockSpec((bt, C, HW), lambda i: (i, 0, 0))] + \
               [_full_spec(a) for a in consts]
    out_spec = pl.BlockSpec((bt, C, HW), lambda i: (i, 0, 0))

    kernel = _make_kernel(nb, bt, C, HW)

    out = pl.pallas_call(
        kernel,
        out_shape=jax.ShapeDtypeStruct((B, C, HW), x.dtype),
        grid=(B // bt,),
        in_specs=in_specs,
        out_specs=out_spec,
        compiler_params=pltpu.CompilerParams(
            dimension_semantics=("parallel",),
            vmem_limit_bytes=vmem_limit),
    )(x2, *consts)

    return out.reshape(B, C, H, W)


# ----------------------------------------------------------------------------
# Pure-JAX reference mirroring the PyTorch forward (for correctness check)
# ----------------------------------------------------------------------------
def reference_forward(x, p, nb, shrink):
    B, C, H, W = x.shape
    cs = C // shrink
    pooled_avg = jnp.mean(x, axis=(2, 3))                     # glb_avg -> (B, C)
    pooled_max = jnp.max(x, axis=(2, 3))                      # glb_max -> (B, C)
    dx = jnp.einsum('oc,bchw->bohw', p['conv1_w'][:, :, 0, 0], x) \
        + p['conv1_b'][None, :, None, None]
    d_avg = jnp.mean(dx, axis=(2, 3))                         # (B, nb)
    d_max = jnp.max(dx, axis=(2, 3))

    def se(pool):
        rep = jnp.tile(pool, (1, nb)).reshape(B, nb, C)       # repeat(1, nb, 1, 1)
        w1 = p['da1_w'][:, :, 0, 0].reshape(nb, cs, C)
        h = jnp.einsum('gsc,bgc->bgs', w1, rep) + p['da1_b'].reshape(nb, cs)
        mean = h.mean(axis=2, keepdims=True)
        var = h.var(axis=2, keepdims=True)
        h = (h - mean) / jnp.sqrt(var + EPS)
        h = h * p['gn1_w'].reshape(nb, cs) + p['gn1_b'].reshape(nb, cs)
        h = jax.nn.relu(h)
        w2 = p['da2_w'][:, :, 0, 0].reshape(nb, C, cs)
        h2 = jnp.einsum('gcs,bgs->bgc', w2, h) + p['da2_b'].reshape(nb, C)
        mean = h2.mean(axis=2, keepdims=True)
        var = h2.var(axis=2, keepdims=True)
        h2 = (h2 - mean) / jnp.sqrt(var + EPS)
        h2 = h2 * p['gn2_w'].reshape(nb, C) + p['gn2_b'].reshape(nb, C)
        return jax.nn.sigmoid(h2)                             # (B, nb, C)

    recal = se(pooled_avg) + se(pooled_max)

    def fc(d):
        z = jax.nn.relu(d @ p['fc1_w'].T + p['fc1_b'])
        z = z @ p['fc2_w'].T + p['fc2_b']
        return jax.nn.softmax(z, axis=1)

    s = fc(d_avg) + fc(d_max)                                 # (B, nb)
    att = jax.nn.sigmoid(jnp.einsum('bgc,bg->bc', recal, s))[:, :, None, None]
    return x * att + x


# ----------------------------------------------------------------------------
if __name__ == "__main__":
    num_block, planes, shrink = 4, 16, 4
    # glb_avg/glb_max are global pooling (kernel_size == spatial extent in the
    # module); tested here with a small spatial extent.
    B, H, W = 3, 12, 12   # HW=144 (not a lane multiple); B=3 (odd, no padding needed)
    nb2 = round(num_block / 2)
    cs = planes // shrink

    key = jax.random.PRNGKey(0)
    ks = jax.random.split(key, 16)
    params = {
        'conv1_w': 0.2 * jax.random.normal(ks[0], (num_block, planes, 1, 1), jnp.float32),
        'conv1_b': 0.1 * jax.random.normal(ks[1], (num_block,), jnp.float32),
        'da1_w': 0.2 * jax.random.normal(ks[2], (cs * num_block, planes, 1, 1), jnp.float32),
        'da1_b': 0.1 * jax.random.normal(ks[3], (cs * num_block,), jnp.float32),
        'gn1_w': 1.0 + 0.1 * jax.random.normal(ks[4], (cs * num_block,), jnp.float32),
        'gn1_b': 0.1 * jax.random.normal(ks[5], (cs * num_block,), jnp.float32),
        'da2_w': 0.2 * jax.random.normal(ks[6], (planes * num_block, cs, 1, 1), jnp.float32),
        'da2_b': 0.1 * jax.random.normal(ks[7], (planes * num_block,), jnp.float32),
        'gn2_w': 1.0 + 0.1 * jax.random.normal(ks[8], (planes * num_block,), jnp.float32),
        'gn2_b': 0.1 * jax.random.normal(ks[9], (planes * num_block,), jnp.float32),
        'fc1_w': 0.3 * jax.random.normal(ks[10], (nb2, num_block), jnp.float32),
        'fc1_b': 0.1 * jax.random.normal(ks[11], (nb2,), jnp.float32),
        'fc2_w': 0.3 * jax.random.normal(ks[12], (num_block, nb2), jnp.float32),
        'fc2_b': 0.1 * jax.random.normal(ks[13], (num_block,), jnp.float32),
    }
    x = jax.random.normal(ks[14], (B, planes, H, W), jnp.float32)

    out = gen_adapt_se_block(x, params, num_block, shrink)
    out = jax.block_until_ready(out)

    ref = reference_forward(x, params, num_block, shrink)
    err = float(jnp.max(jnp.abs(out - ref)))
    assert out.shape == (B, planes, H, W)
    assert err < 1e-2, f"max abs err {err}"
    print("KERNEL_OK")
</pallas_src>

<mosaic_0001>
module attributes {stable_mosaic.version = 11 : i64} {
  func.func @kernel(%arg0: i32, %arg1: memref<3x16x144xf32, #tpu.memory_space<vmem>>, %arg2: memref<4x16xf32, #tpu.memory_space<vmem>>, %arg3: memref<16x4xf32, #tpu.memory_space<vmem>>, %arg4: memref<1x4xf32, #tpu.memory_space<vmem>>, %arg5: memref<4x16x4xf32, #tpu.memory_space<vmem>>, %arg6: memref<4x4xf32, #tpu.memory_space<vmem>>, %arg7: memref<4x4xf32, #tpu.memory_space<vmem>>, %arg8: memref<4x4xf32, #tpu.memory_space<vmem>>, %arg9: memref<4x4x16xf32, #tpu.memory_space<vmem>>, %arg10: memref<4x16xf32, #tpu.memory_space<vmem>>, %arg11: memref<4x16xf32, #tpu.memory_space<vmem>>, %arg12: memref<4x16xf32, #tpu.memory_space<vmem>>, %arg13: memref<4x2xf32, #tpu.memory_space<vmem>>, %arg14: memref<1x2xf32, #tpu.memory_space<vmem>>, %arg15: memref<2x4xf32, #tpu.memory_space<vmem>>, %arg16: memref<1x4xf32, #tpu.memory_space<vmem>>, %arg17: memref<3x16x144xf32, #tpu.memory_space<vmem>>) attributes {dimension_semantics = [#tpu.dimension_semantics<parallel>], iteration_bounds = array<i64: 1>, scalar_prefetch = 0 : i64, scratch_operands = 0 : i64, tpu.core_type = #tpu.core_type<tc>, window_params = [{transform_indices = @transform_0, window_bounds = array<i64: 3, 16, 144>}, {pipeline_mode = #tpu.pipeline_mode<synchronous>, transform_indices = @transform_1, window_bounds = array<i64: 4, 16>}, {pipeline_mode = #tpu.pipeline_mode<synchronous>, transform_indices = @transform_2, window_bounds = array<i64: 16, 4>}, {pipeline_mode = #tpu.pipeline_mode<synchronous>, transform_indices = @transform_3, window_bounds = array<i64: 1, 4>}, {pipeline_mode = #tpu.pipeline_mode<synchronous>, transform_indices = @transform_4, window_bounds = array<i64: 4, 16, 4>}, {pipeline_mode = #tpu.pipeline_mode<synchronous>, transform_indices = @transform_5, window_bounds = array<i64: 4, 4>}, {pipeline_mode = #tpu.pipeline_mode<synchronous>, transform_indices = @transform_6, window_bounds = array<i64: 4, 4>}, {pipeline_mode = #tpu.pipeline_mode<synchronous>, transform_indices = @transform_7, window_bounds = array<i64: 4, 4>}, {pipeline_mode = #tpu.pipeline_mode<synchronous>, transform_indices = @transform_8, window_bounds = array<i64: 4, 4, 16>}, {pipeline_mode = #tpu.pipeline_mode<synchronous>, transform_indices = @transform_9, window_bounds = array<i64: 4, 16>}, {pipeline_mode = #tpu.pipeline_mode<synchronous>, transform_indices = @transform_10, window_bounds = array<i64: 4, 16>}, {pipeline_mode = #tpu.pipeline_mode<synchronous>, transform_indices = @transform_11, window_bounds = array<i64: 4, 16>}, {pipeline_mode = #tpu.pipeline_mode<synchronous>, transform_indices = @transform_12, window_bounds = array<i64: 4, 2>}, {pipeline_mode = #tpu.pipeline_mode<synchronous>, transform_indices = @transform_13, window_bounds = array<i64: 1, 2>}, {pipeline_mode = #tpu.pipeline_mode<synchronous>, transform_indices = @transform_14, window_bounds = array<i64: 2, 4>}, {pipeline_mode = #tpu.pipeline_mode<synchronous>, transform_indices = @transform_15, window_bounds = array<i64: 1, 4>}, {transform_indices = @transform_16, window_bounds = array<i64: 3, 16, 144>}]} {
    %c0 = arith.constant 0 : index
    %c0_0 = arith.constant 0 : index
    %c0_1 = arith.constant 0 : index
    %0 = vector.load %arg1[%c0, %c0_0, %c0_1] : memref<3x16x144xf32, #tpu.memory_space<vmem>>, vector<3x16x144xf32>
    %cst = arith.constant dense<0.000000e+00> : vector<3x16xf32>
    %1 = vector.multi_reduction <add>, %0, %cst [2] : vector<3x16x144xf32> to vector<3x16xf32>
    %cst_2 = arith.constant 0.0069444445 : f32
    %2 = vector.broadcast %cst_2 : f32 to vector<3x16xf32>
    %3 = arith.mulf %1, %2 : vector<3x16xf32>
    %c0_3 = arith.constant 0 : index
    %c0_4 = arith.constant 0 : index
    %c0_5 = arith.constant 0 : index
    %4 = vector.load %arg1[%c0_3, %c0_4, %c0_5] : memref<3x16x144xf32, #tpu.memory_space<vmem>>, vector<3x16x144xf32>
    %cst_6 = arith.constant dense<0xFF800000> : vector<3x16xf32>
    %5 = vector.multi_reduction <maximumf>, %4, %cst_6 [2] : vector<3x16x144xf32> to vector<3x16xf32>
    %c0_7 = arith.constant 0 : index
    %c0_8 = arith.constant 0 : index
    %6 = vector.load %arg4[%c0_7, %c0_8] : memref<1x4xf32, #tpu.memory_space<vmem>>, vector<1x4xf32>
    %c0_9 = arith.constant 0 : index
    %c0_10 = arith.constant 0 : index
    %7 = vector.load %arg3[%c0_9, %c0_10] : memref<16x4xf32, #tpu.memory_space<vmem>>, vector<16x4xf32>
    %cst_11 = arith.constant dense<0.000000e+00> : vector<3x4xf32>
    %8 = tpu.matmul %3, %7, %cst_11 {dimension_numbers = #tpu.dot_dimension_numbers<[1], [0], [0], [1], [0, 0, 1, 1], [], []>} : vector<3x16xf32>, vector<16x4xf32>, vector<3x4xf32> -> vector<3x4xf32>
    %9 = vector.broadcast %6 : vector<1x4xf32> to vector<3x4xf32>
    %10 = arith.addf %8, %9 : vector<3x4xf32>
    %c0_12 = arith.constant 0 : index
    %c0_13 = arith.constant 0 : index
    %11 = vector.load %arg2[%c0_12, %c0_13] : memref<4x16xf32, #tpu.memory_space<vmem>>, vector<4x16xf32>
    %c0_14 = arith.constant 0 : index
    %c0_15 = arith.constant 0 : index
    %c0_16 = arith.constant 0 : index
    %12 = vector.load %arg1[%c0_14, %c0_15, %c0_16] : memref<3x16x144xf32, #tpu.memory_space<vmem>>, vector<1x16x144xf32>
    %13 = vector.shape_cast %12 : vector<1x16x144xf32> to vector<16x144xf32>
    %cst_17 = arith.constant dense<0.000000e+00> : vector<4x144xf32>
    %14 = tpu.matmul %11, %13, %cst_17 {dimension_numbers = #tpu.dot_dimension_numbers<[1], [0], [0], [1], [0, 0, 1, 1], [], []>} : vector<4x16xf32>, vector<16x144xf32>, vector<4x144xf32> -> vector<4x144xf32>
    %cst_18 = arith.constant dense<0xFF800000> : vector<4xf32>
    %15 = vector.multi_reduction <maximumf>, %14, %cst_18 [1] : vector<4x144xf32> to vector<4xf32>
    %16 = vector.shape_cast %15 : vector<4xf32> to vector<4x1xf32>
    %17 = tpu.transpose %16, [1, 0] : vector<4x1xf32> -> vector<1x4xf32>
    %c1 = arith.constant 1 : index
    %c0_19 = arith.constant 0 : index
    %c0_20 = arith.constant 0 : index
    %18 = vector.load %arg1[%c1, %c0_19, %c0_20] : memref<3x16x144xf32, #tpu.memory_space<vmem>>, vector<1x16x144xf32>
    %19 = vector.shape_cast %18 : vector<1x16x144xf32> to vector<16x144xf32>
    %cst_21 = arith.constant dense<0.000000e+00> : vector<4x144xf32>
    %20 = tpu.matmul %11, %19, %cst_21 {dimension_numbers = #tpu.dot_dimension_numbers<[1], [0], [0], [1], [0, 0, 1, 1], [], []>} : vector<4x16xf32>, vector<16x144xf32>, vector<4x144xf32> -> vector<4x144xf32>
    %cst_22 = arith.constant dense<0xFF800000> : vector<4xf32>
    %21 = vector.multi_reduction <maximumf>, %20, %cst_22 [1] : vector<4x144xf32> to vector<4xf32>
    %22 = vector.shape_cast %21 : vector<4xf32> to vector<4x1xf32>
    %23 = tpu.transpose %22, [1, 0] : vector<4x1xf32> -> vector<1x4xf32>
    %c2 = arith.constant 2 : index
    %c0_23 = arith.constant 0 : index
    %c0_24 = arith.constant 0 : index
    %24 = vector.load %arg1[%c2, %c0_23, %c0_24] : memref<3x16x144xf32, #tpu.memory_space<vmem>>, vector<1x16x144xf32>
    %25 = vector.shape_cast %24 : vector<1x16x144xf32> to vector<16x144xf32>
    %cst_25 = arith.constant dense<0.000000e+00> : vector<4x144xf32>
    %26 = tpu.matmul %11, %25, %cst_25 {dimension_numbers = #tpu.dot_dimension_numbers<[1], [0], [0], [1], [0, 0, 1, 1], [], []>} : vector<4x16xf32>, vector<16x144xf32>, vector<4x144xf32> -> vector<4x144xf32>
    %cst_26 = arith.constant dense<0xFF800000> : vector<4xf32>
    %27 = vector.multi_reduction <maximumf>, %26, %cst_26 [1] : vector<4x144xf32> to vector<4xf32>
    %28 = vector.shape_cast %27 : vector<4xf32> to vector<4x1xf32>
    %29 = tpu.transpose %28, [1, 0] : vector<4x1xf32> -> vector<1x4xf32>
    %30 = tpu.concatenate %17, %23, %29 in 0 : vector<1x4xf32>, vector<1x4xf32>, vector<1x4xf32> -> vector<3x4xf32>
    %31 = vector.broadcast %6 : vector<1x4xf32> to vector<3x4xf32>
    %32 = arith.addf %30, %31 : vector<3x4xf32>
    %c0_27 = arith.constant 0 : index
    %c0_28 = arith.constant 0 : index
    %33 = vector.load %arg13[%c0_27, %c0_28] : memref<4x2xf32, #tpu.memory_space<vmem>>, vector<4x2xf32>
    %c0_29 = arith.constant 0 : index
    %c0_30 = arith.constant 0 : index
    %34 = vector.load %arg14[%c0_29, %c0_30] : memref<1x2xf32, #tpu.memory_space<vmem>>, vector<1x2xf32>
    %c0_31 = arith.constant 0 : index
    %c0_32 = arith.constant 0 : index
    %35 = vector.load %arg15[%c0_31, %c0_32] : memref<2x4xf32, #tpu.memory_space<vmem>>, vector<2x4xf32>
    %c0_33 = arith.constant 0 : index
    %c0_34 = arith.constant 0 : index
    %36 = vector.load %arg16[%c0_33, %c0_34] : memref<1x4xf32, #tpu.memory_space<vmem>>, vector<1x4xf32>
    %cst_35 = arith.constant dense<0.000000e+00> : vector<3x2xf32>
    %37 = tpu.matmul %10, %33, %cst_35 {dimension_numbers = #tpu.dot_dimension_numbers<[1], [0], [0], [1], [0, 0, 1, 1], [], []>} : vector<3x4xf32>, vector<4x2xf32>, vector<3x2xf32> -> vector<3x2xf32>
    %38 = vector.broadcast %34 : vector<1x2xf32> to vector<3x2xf32>
    %39 = arith.addf %37, %38 : vector<3x2xf32>
    %cst_36 = arith.constant 0.000000e+00 : f32
    %40 = vector.broadcast %cst_36 : f32 to vector<3x2xf32>
    %41 = arith.maximumf %39, %40 : vector<3x2xf32>
    %cst_37 = arith.constant dense<0.000000e+00> : vector<3x4xf32>
    %42 = tpu.matmul %41, %35, %cst_37 {dimension_numbers = #tpu.dot_dimension_numbers<[1], [0], [0], [1], [0, 0, 1, 1], [], []>} : vector<3x2xf32>, vector<2x4xf32>, vector<3x4xf32> -> vector<3x4xf32>
    %43 = vector.broadcast %36 : vector<1x4xf32> to vector<3x4xf32>
    %44 = arith.addf %42, %43 : vector<3x4xf32>
    %cst_38 = arith.constant dense<0xFF800000> : vector<3xf32>
    %45 = vector.multi_reduction <maximumf>, %44, %cst_38 [1] : vector<3x4xf32> to vector<3xf32>
    %46 = vector.shape_cast %45 : vector<3xf32> to vector<3x1xf32>
    %47 = vector.broadcast %46 : vector<3x1xf32> to vector<3x4xf32>
    %48 = arith.subf %44, %47 : vector<3x4xf32>
    %49 = math.exp %48 : vector<3x4xf32>
    %cst_39 = arith.constant dense<0.000000e+00> : vector<3xf32>
    %50 = vector.multi_reduction <add>, %49, %cst_39 [1] : vector<3x4xf32> to vector<3xf32>
    %51 = vector.shape_cast %50 : vector<3xf32> to vector<3x1xf32>
    %52 = vector.broadcast %51 : vector<3x1xf32> to vector<3x4xf32>
    %53 = arith.divf %49, %52 : vector<3x4xf32>
    %cst_40 = arith.constant dense<0.000000e+00> : vector<3x2xf32>
    %54 = tpu.matmul %32, %33, %cst_40 {dimension_numbers = #tpu.dot_dimension_numbers<[1], [0], [0], [1], [0, 0, 1, 1], [], []>} : vector<3x4xf32>, vector<4x2xf32>, vector<3x2xf32> -> vector<3x2xf32>
    %55 = vector.broadcast %34 : vector<1x2xf32> to vector<3x2xf32>
    %56 = arith.addf %54, %55 : vector<3x2xf32>
    %cst_41 = arith.constant 0.000000e+00 : f32
    %57 = vector.broadcast %cst_41 : f32 to vector<3x2xf32>
    %58 = arith.maximumf %56, %57 : vector<3x2xf32>
    %cst_42 = arith.constant dense<0.000000e+00> : vector<3x4xf32>
    %59 = tpu.matmul %58, %35, %cst_42 {dimension_numbers = #tpu.dot_dimension_numbers<[1], [0], [0], [1], [0, 0, 1, 1], [], []>} : vector<3x2xf32>, vector<2x4xf32>, vector<3x4xf32> -> vector<3x4xf32>
    %60 = vector.broadcast %36 : vector<1x4xf32> to vector<3x4xf32>
    %61 = arith.addf %59, %60 : vector<3x4xf32>
    %cst_43 = arith.constant dense<0xFF800000> : vector<3xf32>
    %62 = vector.multi_reduction <maximumf>, %61, %cst_43 [1] : vector<3x4xf32> to vector<3xf32>
    %63 = vector.shape_cast %62 : vector<3xf32> to vector<3x1xf32>
    %64 = vector.broadcast %63 : vector<3x1xf32> to vector<3x4xf32>
    %65 = arith.subf %61, %64 : vector<3x4xf32>
    %66 = math.exp %65 : vector<3x4xf32>
    %cst_44 = arith.constant dense<0.000000e+00> : vector<3xf32>
    %67 = vector.multi_reduction <add>, %66, %cst_44 [1] : vector<3x4xf32> to vector<3xf32>
    %68 = vector.shape_cast %67 : vector<3xf32> to vector<3x1xf32>
    %69 = vector.broadcast %68 : vector<3x1xf32> to vector<3x4xf32>
    %70 = arith.divf %66, %69 : vector<3x4xf32>
    %71 = arith.addf %53, %70 : vector<3x4xf32>
    %c0_45 = arith.constant 0 : index
    %c0_46 = arith.constant 0 : index
    %72 = vector.load %arg6[%c0_45, %c0_46] : memref<4x4xf32, #tpu.memory_space<vmem>>, vector<4x4xf32>
    %c0_47 = arith.constant 0 : index
    %c0_48 = arith.constant 0 : index
    %73 = vector.load %arg7[%c0_47, %c0_48] : memref<4x4xf32, #tpu.memory_space<vmem>>, vector<4x4xf32>
    %c0_49 = arith.constant 0 : index
    %c0_50 = arith.constant 0 : index
    %74 = vector.load %arg8[%c0_49, %c0_50] : memref<4x4xf32, #tpu.memory_space<vmem>>, vector<4x4xf32>
    %c0_51 = arith.constant 0 : index
    %c0_52 = arith.constant 0 : index
    %75 = vector.load %arg10[%c0_51, %c0_52] : memref<4x16xf32, #tpu.memory_space<vmem>>, vector<4x16xf32>
    %c0_53 = arith.constant 0 : index
    %c0_54 = arith.constant 0 : index
    %76 = vector.load %arg11[%c0_53, %c0_54] : memref<4x16xf32, #tpu.memory_space<vmem>>, vector<4x16xf32>
    %c0_55 = arith.constant 0 : index
    %c0_56 = arith.constant 0 : index
    %77 = vector.load %arg12[%c0_55, %c0_56] : memref<4x16xf32, #tpu.memory_space<vmem>>, vector<4x16xf32>
    %cst_57 = arith.constant 0.000000e+00 : f32
    %78 = vector.broadcast %cst_57 : f32 to vector<3x16xf32>
    %c0_58 = arith.constant 0 : index
    %c0_59 = arith.constant 0 : index
    %c0_60 = arith.constant 0 : index
    %79 = vector.load %arg5[%c0_58, %c0_59, %c0_60] : memref<4x16x4xf32, #tpu.memory_space<vmem>>, vector<1x16x4xf32>
    %80 = vector.shape_cast %79 : vector<1x16x4xf32> to vector<16x4xf32>
    %cst_61 = arith.constant dense<0.000000e+00> : vector<3x4xf32>
    %81 = tpu.matmul %3, %80, %cst_61 {dimension_numbers = #tpu.dot_dimension_numbers<[1], [0], [0], [1], [0, 0, 1, 1], [], []>} : vector<3x16xf32>, vector<16x4xf32>, vector<3x4xf32> -> vector<3x4xf32>
    %82 = vector.extract_strided_slice %72 {offsets = [0, 0], sizes = [1, 4], strides = [1, 1]} : vector<4x4xf32> to vector<1x4xf32>
    %83 = vector.broadcast %82 : vector<1x4xf32> to vector<3x4xf32>
    %84 = arith.addf %81, %83 : vector<3x4xf32>
    %cst_62 = arith.constant dense<0.000000e+00> : vector<3xf32>
    %85 = vector.multi_reduction <add>, %84, %cst_62 [1] : vector<3x4xf32> to vector<3xf32>
    %86 = vector.shape_cast %85 : vector<3xf32> to vector<3x1xf32>
    %cst_63 = arith.constant 4.000000e+00 : f32
    %87 = vector.broadcast %cst_63 : f32 to vector<3x1xf32>
    %88 = arith.divf %86, %87 : vector<3x1xf32>
    %89 = vector.broadcast %88 : vector<3x1xf32> to vector<3x4xf32>
    %90 = arith.subf %84, %89 : vector<3x4xf32>
    %91 = arith.mulf %90, %90 : vector<3x4xf32>
    %cst_64 = arith.constant dense<0.000000e+00> : vector<3xf32>
    %92 = vector.multi_reduction <add>, %91, %cst_64 [1] : vector<3x4xf32> to vector<3xf32>
    %93 = vector.shape_cast %92 : vector<3xf32> to vector<3x1xf32>
    %cst_65 = arith.constant 4.000000e+00 : f32
    %94 = vector.broadcast %cst_65 : f32 to vector<3x1xf32>
    %95 = arith.divf %93, %94 : vector<3x1xf32>
    %cst_66 = arith.constant 9.99999974E-6 : f32
    %96 = vector.broadcast %cst_66 : f32 to vector<3x1xf32>
    %97 = arith.addf %95, %96 : vector<3x1xf32>
    %98 = math.rsqrt %97 : vector<3x1xf32>
    %99 = vector.broadcast %98 : vector<3x1xf32> to vector<3x4xf32>
    %100 = arith.mulf %90, %99 : vector<3x4xf32>
    %101 = vector.extract_strided_slice %73 {offsets = [0, 0], sizes = [1, 4], strides = [1, 1]} : vector<4x4xf32> to vector<1x4xf32>
    %102 = vector.broadcast %101 : vector<1x4xf32> to vector<3x4xf32>
    %103 = arith.mulf %100, %102 : vector<3x4xf32>
    %104 = vector.extract_strided_slice %74 {offsets = [0, 0], sizes = [1, 4], strides = [1, 1]} : vector<4x4xf32> to vector<1x4xf32>
    %105 = vector.broadcast %104 : vector<1x4xf32> to vector<3x4xf32>
    %106 = arith.addf %103, %105 : vector<3x4xf32>
    %cst_67 = arith.constant 0.000000e+00 : f32
    %107 = vector.broadcast %cst_67 : f32 to vector<3x4xf32>
    %108 = arith.maximumf %106, %107 : vector<3x4xf32>
    %c0_68 = arith.constant 0 : index
    %c0_69 = arith.constant 0 : index
    %c0_70 = arith.constant 0 : index
    %109 = vector.load %arg9[%c0_68, %c0_69, %c0_70] : memref<4x4x16xf32, #tpu.memory_space<vmem>>, vector<1x4x16xf32>
    %110 = vector.shape_cast %109 : vector<1x4x16xf32> to vector<4x16xf32>
    %cst_71 = arith.constant dense<0.000000e+00> : vector<3x16xf32>
    %111 = tpu.matmul %108, %110, %cst_71 {dimension_numbers = #tpu.dot_dimension_numbers<[1], [0], [0], [1], [0, 0, 1, 1], [], []>} : vector<3x4xf32>, vector<4x16xf32>, vector<3x16xf32> -> vector<3x16xf32>
    %112 = vector.extract_strided_slice %75 {offsets = [0, 0], sizes = [1, 16], strides = [1, 1]} : vector<4x16xf32> to vector<1x16xf32>
    %113 = vector.broadcast %112 : vector<1x16xf32> to vector<3x16xf32>
    %114 = arith.addf %111, %113 : vector<3x16xf32>
    %cst_72 = arith.constant dense<0.000000e+00> : vector<3xf32>
    %115 = vector.multi_reduction <add>, %114, %cst_72 [1] : vector<3x16xf32> to vector<3xf32>
    %116 = vector.shape_cast %115 : vector<3xf32> to vector<3x1xf32>
    %cst_73 = arith.constant 1.600000e+01 : f32
    %117 = vector.broadcast %cst_73 : f32 to vector<3x1xf32>
    %118 = arith.divf %116, %117 : vector<3x1xf32>
    %119 = vector.broadcast %118 : vector<3x1xf32> to vector<3x16xf32>
    %120 = arith.subf %114, %119 : vector<3x16xf32>
    %121 = arith.mulf %120, %120 : vector<3x16xf32>
    %cst_74 = arith.constant dense<0.000000e+00> : vector<3xf32>
    %122 = vector.multi_reduction <add>, %121, %cst_74 [1] : vector<3x16xf32> to vector<3xf32>
    %123 = vector.shape_cast %122 : vector<3xf32> to vector<3x1xf32>
    %cst_75 = arith.constant 1.600000e+01 : f32
    %124 = vector.broadcast %cst_75 : f32 to vector<3x1xf32>
    %125 = arith.divf %123, %124 : vector<3x1xf32>
    %cst_76 = arith.constant 9.99999974E-6 : f32
    %126 = vector.broadcast %cst_76 : f32 to vector<3x1xf32>
    %127 = arith.addf %125, %126 : vector<3x1xf32>
    %128 = math.rsqrt %127 : vector<3x1xf32>
    %129 = vector.broadcast %128 : vector<3x1xf32> to vector<3x16xf32>
    %130 = arith.mulf %120, %129 : vector<3x16xf32>
    %131 = vector.extract_strided_slice %76 {offsets = [0, 0], sizes = [1, 16], strides = [1, 1]} : vector<4x16xf32> to vector<1x16xf32>
    %132 = vector.broadcast %131 : vector<1x16xf32> to vector<3x16xf32>
    %133 = arith.mulf %130, %132 : vector<3x16xf32>
    %134 = vector.extract_strided_slice %77 {offsets = [0, 0], sizes = [1, 16], strides = [1, 1]} : vector<4x16xf32> to vector<1x16xf32>
    %135 = vector.broadcast %134 : vector<1x16xf32> to vector<3x16xf32>
    %136 = arith.addf %133, %135 : vector<3x16xf32>
    %137 = arith.negf %136 : vector<3x16xf32>
    %138 = math.exp %137 : vector<3x16xf32>
    %cst_77 = arith.constant 1.000000e+00 : f32
    %139 = vector.broadcast %cst_77 : f32 to vector<3x16xf32>
    %140 = arith.addf %139, %138 : vector<3x16xf32>
    %141 = arith.divf %139, %140 : vector<3x16xf32>
    %c0_78 = arith.constant 0 : index
    %c0_79 = arith.constant 0 : index
    %c0_80 = arith.constant 0 : index
    %142 = vector.load %arg5[%c0_78, %c0_79, %c0_80] : memref<4x16x4xf32, #tpu.memory_space<vmem>>, vector<1x16x4xf32>
    %143 = vector.shape_cast %142 : vector<1x16x4xf32> to vector<16x4xf32>
    %cst_81 = arith.constant dense<0.000000e+00> : vector<3x4xf32>
    %144 = tpu.matmul %5, %143, %cst_81 {dimension_numbers = #tpu.dot_dimension_numbers<[1], [0], [0], [1], [0, 0, 1, 1], [], []>} : vector<3x16xf32>, vector<16x4xf32>, vector<3x4xf32> -> vector<3x4xf32>
    %145 = vector.extract_strided_slice %72 {offsets = [0, 0], sizes = [1, 4], strides = [1, 1]} : vector<4x4xf32> to vector<1x4xf32>
    %146 = vector.broadcast %145 : vector<1x4xf32> to vector<3x4xf32>
    %147 = arith.addf %144, %146 : vector<3x4xf32>
    %cst_82 = arith.constant dense<0.000000e+00> : vector<3xf32>
    %148 = vector.multi_reduction <add>, %147, %cst_82 [1] : vector<3x4xf32> to vector<3xf32>
    %149 = vector.shape_cast %148 : vector<3xf32> to vector<3x1xf32>
    %cst_83 = arith.constant 4.000000e+00 : f32
    %150 = vector.broadcast %cst_83 : f32 to vector<3x1xf32>
    %151 = arith.divf %149, %150 : vector<3x1xf32>
    %152 = vector.broadcast %151 : vector<3x1xf32> to vector<3x4xf32>
    %153 = arith.subf %147, %152 : vector<3x4xf32>
    %154 = arith.mulf %153, %153 : vector<3x4xf32>
    %cst_84 = arith.constant dense<0.000000e+00> : vector<3xf32>
    %155 = vector.multi_reduction <add>, %154, %cst_84 [1] : vector<3x4xf32> to vector<3xf32>
    %156 = vector.shape_cast %155 : vector<3xf32> to vector<3x1xf32>
    %cst_85 = arith.constant 4.000000e+00 : f32
    %157 = vector.broadcast %cst_85 : f32 to vector<3x1xf32>
    %158 = arith.divf %156, %157 : vector<3x1xf32>
    %cst_86 = arith.constant 9.99999974E-6 : f32
    %159 = vector.broadcast %cst_86 : f32 to vector<3x1xf32>
    %160 = arith.addf %158, %159 : vector<3x1xf32>
    %161 = math.rsqrt %160 : vector<3x1xf32>
    %162 = vector.broadcast %161 : vector<3x1xf32> to vector<3x4xf32>
    %163 = arith.mulf %153, %162 : vector<3x4xf32>
    %164 = vector.extract_strided_slice %73 {offsets = [0, 0], sizes = [1, 4], strides = [1, 1]} : vector<4x4xf32> to vector<1x4xf32>
    %165 = vector.broadcast %164 : vector<1x4xf32> to vector<3x4xf32>
    %166 = arith.mulf %163, %165 : vector<3x4xf32>
    %167 = vector.extract_strided_slice %74 {offsets = [0, 0], sizes = [1, 4], strides = [1, 1]} : vector<4x4xf32> to vector<1x4xf32>
    %168 = vector.broadcast %167 : vector<1x4xf32> to vector<3x4xf32>
    %169 = arith.addf %166, %168 : vector<3x4xf32>
    %cst_87 = arith.constant 0.000000e+00 : f32
    %170 = vector.broadcast %cst_87 : f32 to vector<3x4xf32>
    %171 = arith.maximumf %169, %170 : vector<3x4xf32>
    %c0_88 = arith.constant 0 : index
    %c0_89 = arith.constant 0 : index
    %c0_90 = arith.constant 0 : index
    %172 = vector.load %arg9[%c0_88, %c0_89, %c0_90] : memref<4x4x16xf32, #tpu.memory_space<vmem>>, vector<1x4x16xf32>
    %173 = vector.shape_cast %172 : vector<1x4x16xf32> to vector<4x16xf32>
    %cst_91 = arith.constant dense<0.000000e+00> : vector<3x16xf32>
    %174 = tpu.matmul %171, %173, %cst_91 {dimension_numbers = #tpu.dot_dimension_numbers<[1], [0], [0], [1], [0, 0, 1, 1], [], []>} : vector<3x4xf32>, vector<4x16xf32>, vector<3x16xf32> -> vector<3x16xf32>
    %175 = vector.extract_strided_slice %75 {offsets = [0, 0], sizes = [1, 16], strides = [1, 1]} : vector<4x16xf32> to vector<1x16xf32>
    %176 = vector.broadcast %175 : vector<1x16xf32> to vector<3x16xf32>
    %177 = arith.addf %174, %176 : vector<3x16xf32>
    %cst_92 = arith.constant dense<0.000000e+00> : vector<3xf32>
    %178 = vector.multi_reduction <add>, %177, %cst_92 [1] : vector<3x16xf32> to vector<3xf32>
    %179 = vector.shape_cast %178 : vector<3xf32> to vector<3x1xf32>
    %cst_93 = arith.constant 1.600000e+01 : f32
    %180 = vector.broadcast %cst_93 : f32 to vector<3x1xf32>
    %181 = arith.divf %179, %180 : vector<3x1xf32>
    %182 = vector.broadcast %181 : vector<3x1xf32> to vector<3x16xf32>
    %183 = arith.subf %177, %182 : vector<3x16xf32>
    %184 = arith.mulf %183, %183 : vector<3x16xf32>
    %cst_94 = arith.constant dense<0.000000e+00> : vector<3xf32>
    %185 = vector.multi_reduction <add>, %184, %cst_94 [1] : vector<3x16xf32> to vector<3xf32>
    %186 = vector.shape_cast %185 : vector<3xf32> to vector<3x1xf32>
    %cst_95 = arith.constant 1.600000e+01 : f32
    %187 = vector.broadcast %cst_95 : f32 to vector<3x1xf32>
    %188 = arith.divf %186, %187 : vector<3x1xf32>
    %cst_96 = arith.constant 9.99999974E-6 : f32
    %189 = vector.broadcast %cst_96 : f32 to vector<3x1xf32>
    %190 = arith.addf %188, %189 : vector<3x1xf32>
    %191 = math.rsqrt %190 : vector<3x1xf32>
    %192 = vector.broadcast %191 : vector<3x1xf32> to vector<3x16xf32>
    %193 = arith.mulf %183, %192 : vector<3x16xf32>
    %194 = vector.extract_strided_slice %76 {offsets = [0, 0], sizes = [1, 16], strides = [1, 1]} : vector<4x16xf32> to vector<1x16xf32>
    %195 = vector.broadcast %194 : vector<1x16xf32> to vector<3x16xf32>
    %196 = arith.mulf %193, %195 : vector<3x16xf32>
    %197 = vector.extract_strided_slice %77 {offsets = [0, 0], sizes = [1, 16], strides = [1, 1]} : vector<4x16xf32> to vector<1x16xf32>
    %198 = vector.broadcast %197 : vector<1x16xf32> to vector<3x16xf32>
    %199 = arith.addf %196, %198 : vector<3x16xf32>
    %200 = arith.negf %199 : vector<3x16xf32>
    %201 = math.exp %200 : vector<3x16xf32>
    %cst_97 = arith.constant 1.000000e+00 : f32
    %202 = vector.broadcast %cst_97 : f32 to vector<3x16xf32>
    %203 = arith.addf %202, %201 : vector<3x16xf32>
    %204 = arith.divf %202, %203 : vector<3x16xf32>
    %205 = arith.addf %141, %204 : vector<3x16xf32>
    %206 = vector.extract_strided_slice %71 {offsets = [0, 0], sizes = [3, 1], strides = [1, 1]} : vector<3x4xf32> to vector<3x1xf32>
    %207 = vector.broadcast %206 : vector<3x1xf32> to vector<3x16xf32>
    %208 = arith.mulf %205, %207 : vector<3x16xf32>
    %209 = arith.addf %78, %208 : vector<3x16xf32>
    %c1_98 = arith.constant 1 : index
    %c0_99 = arith.constant 0 : index
    %c0_100 = arith.constant 0 : index
    %210 = vector.load %arg5[%c1_98, %c0_99, %c0_100] : memref<4x16x4xf32, #tpu.memory_space<vmem>>, vector<1x16x4xf32>
    %211 = vector.shape_cast %210 : vector<1x16x4xf32> to vector<16x4xf32>
    %cst_101 = arith.constant dense<0.000000e+00> : vector<3x4xf32>
    %212 = tpu.matmul %3, %211, %cst_101 {dimension_numbers = #tpu.dot_dimension_numbers<[1], [0], [0], [1], [0, 0, 1, 1], [], []>} : vector<3x16xf32>, vector<16x4xf32>, vector<3x4xf32> -> vector<3x4xf32>
    %213 = vector.extract_strided_slice %72 {offsets = [1, 0], sizes = [1, 4], strides = [1, 1]} : vector<4x4xf32> to vector<1x4xf32>
    %214 = vector.broadcast %213 : vector<1x4xf32> to vector<3x4xf32>
    %215 = arith.addf %212, %214 : vector<3x4xf32>
    %cst_102 = arith.constant dense<0.000000e+00> : vector<3xf32>
    %216 = vector.multi_reduction <add>, %215, %cst_102 [1] : vector<3x4xf32> to vector<3xf32>
    %217 = vector.shape_cast %216 : vector<3xf32> to vector<3x1xf32>
    %cst_103 = arith.constant 4.000000e+00 : f32
    %218 = vector.broadcast %cst_103 : f32 to vector<3x1xf32>
    %219 = arith.divf %217, %218 : vector<3x1xf32>
    %220 = vector.broadcast %219 : vector<3x1xf32> to vector<3x4xf32>
    %221 = arith.subf %215, %220 : vector<3x4xf32>
    %222 = arith.mulf %221, %221 : vector<3x4xf32>
    %cst_104 = arith.constant dense<0.000000e+00> : vector<3xf32>
    %223 = vector.multi_reduction <add>, %222, %cst_104 [1] : vector<3x4xf32> to vector<3xf32>
    %224 = vector.shape_cast %223 : vector<3xf32> to vector<3x1xf32>
    %cst_105 = arith.constant 4.000000e+00 : f32
    %225 = vector.broadcast %cst_105 : f32 to vector<3x1xf32>
    %226 = arith.divf %224, %225 : vector<3x1xf32>
    %cst_106 = arith.constant 9.99999974E-6 : f32
    %227 = vector.broadcast %cst_106 : f32 to vector<3x1xf32>
    %228 = arith.addf %226, %227 : vector<3x1xf32>
    %229 = math.rsqrt %228 : vector<3x1xf32>
    %230 = vector.broadcast %229 : vector<3x1xf32> to vector<3x4xf32>
    %231 = arith.mulf %221, %230 : vector<3x4xf32>
    %232 = vector.extract_strided_slice %73 {offsets = [1, 0], sizes = [1, 4], strides = [1, 1]} : vector<4x4xf32> to vector<1x4xf32>
    %233 = vector.broadcast %232 : vector<1x4xf32> to vector<3x4xf32>
    %234 = arith.mulf %231, %233 : vector<3x4xf32>
    %235 = vector.extract_strided_slice %74 {offsets = [1, 0], sizes = [1, 4], strides = [1, 1]} : vector<4x4xf32> to vector<1x4xf32>
    %236 = vector.broadcast %235 : vector<1x4xf32> to vector<3x4xf32>
    %237 = arith.addf %234, %236 : vector<3x4xf32>
    %cst_107 = arith.constant 0.000000e+00 : f32
    %238 = vector.broadcast %cst_107 : f32 to vector<3x4xf32>
    %239 = arith.maximumf %237, %238 : vector<3x4xf32>
    %c1_108 = arith.constant 1 : index
    %c0_109 = arith.constant 0 : index
    %c0_110 = arith.constant 0 : index
    %240 = vector.load %arg9[%c1_108, %c0_109, %c0_110] : memref<4x4x16xf32, #tpu.memory_space<vmem>>, vector<1x4x16xf32>
    %241 = vector.shape_cast %240 : vector<1x4x16xf32> to vector<4x16xf32>
    %cst_111 = arith.constant dense<0.000000e+00> : vector<3x16xf32>
    %242 = tpu.matmul %239, %241, %cst_111 {dimension_numbers = #tpu.dot_dimension_numbers<[1], [0], [0], [1], [0, 0, 1, 1], [], []>} : vector<3x4xf32>, vector<4x16xf32>, vector<3x16xf32> -> vector<3x16xf32>
    %243 = vector.extract_strided_slice %75 {offsets = [1, 0], sizes = [1, 16], strides = [1, 1]} : vector<4x16xf32> to vector<1x16xf32>
    %244 = vector.broadcast %243 : vector<1x16xf32> to vector<3x16xf32>
    %245 = arith.addf %242, %244 : vector<3x16xf32>
    %cst_112 = arith.constant dense<0.000000e+00> : vector<3xf32>
    %246 = vector.multi_reduction <add>, %245, %cst_112 [1] : vector<3x16xf32> to vector<3xf32>
    %247 = vector.shape_cast %246 : vector<3xf32> to vector<3x1xf32>
    %cst_113 = arith.constant 1.600000e+01 : f32
    %248 = vector.broadcast %cst_113 : f32 to vector<3x1xf32>
    %249 = arith.divf %247, %248 : vector<3x1xf32>
    %250 = vector.broadcast %249 : vector<3x1xf32> to vector<3x16xf32>
    %251 = arith.subf %245, %250 : vector<3x16xf32>
    %252 = arith.mulf %251, %251 : vector<3x16xf32>
    %cst_114 = arith.constant dense<0.000000e+00> : vector<3xf32>
    %253 = vector.multi_reduction <add>, %252, %cst_114 [1] : vector<3x16xf32> to vector<3xf32>
    %254 = vector.shape_cast %253 : vector<3xf32> to vector<3x1xf32>
    %cst_115 = arith.constant 1.600000e+01 : f32
    %255 = vector.broadcast %cst_115 : f32 to vector<3x1xf32>
    %256 = arith.divf %254, %255 : vector<3x1xf32>
    %cst_116 = arith.constant 9.99999974E-6 : f32
    %257 = vector.broadcast %cst_116 : f32 to vector<3x1xf32>
    %258 = arith.addf %256, %257 : vector<3x1xf32>
    %259 = math.rsqrt %258 : vector<3x1xf32>
    %260 = vector.broadcast %259 : vector<3x1xf32> to vector<3x16xf32>
    %261 = arith.mulf %251, %260 : vector<3x16xf32>
    %262 = vector.extract_strided_slice %76 {offsets = [1, 0], sizes = [1, 16], strides = [1, 1]} : vector<4x16xf32> to vector<1x16xf32>
    %263 = vector.broadcast %262 : vector<1x16xf32> to vector<3x16xf32>
    %264 = arith.mulf %261, %263 : vector<3x16xf32>
    %265 = vector.extract_strided_slice %77 {offsets = [1, 0], sizes = [1, 16], strides = [1, 1]} : vector<4x16xf32> to vector<1x16xf32>
    %266 = vector.broadcast %265 : vector<1x16xf32> to vector<3x16xf32>
    %267 = arith.addf %264, %266 : vector<3x16xf32>
    %268 = arith.negf %267 : vector<3x16xf32>
    %269 = math.exp %268 : vector<3x16xf32>
    %cst_117 = arith.constant 1.000000e+00 : f32
    %270 = vector.broadcast %cst_117 : f32 to vector<3x16xf32>
    %271 = arith.addf %270, %269 : vector<3x16xf32>
    %272 = arith.divf %270, %271 : vector<3x16xf32>
    %c1_118 = arith.constant 1 : index
    %c0_119 = arith.constant 0 : index
    %c0_120 = arith.constant 0 : index
    %273 = vector.load %arg5[%c1_118, %c0_119, %c0_120] : memref<4x16x4xf32, #tpu.memory_space<vmem>>, vector<1x16x4xf32>
    %274 = vector.shape_cast %273 : vector<1x16x4xf32> to vector<16x4xf32>
    %cst_121 = arith.constant dense<0.000000e+00> : vector<3x4xf32>
    %275 = tpu.matmul %5, %274, %cst_121 {dimension_numbers = #tpu.dot_dimension_numbers<[1], [0], [0], [1], [0, 0, 1, 1], [], []>} : vector<3x16xf32>, vector<16x4xf32>, vector<3x4xf32> -> vector<3x4xf32>
    %276 = vector.extract_strided_slice %72 {offsets = [1, 0], sizes = [1, 4], strides = [1, 1]} : vector<4x4xf32> to vector<1x4xf32>
    %277 = vector.broadcast %276 : vector<1x4xf32> to vector<3x4xf32>
    %278 = arith.addf %275, %277 : vector<3x4xf32>
    %cst_122 = arith.constant dense<0.000000e+00> : vector<3xf32>
    %279 = vector.multi_reduction <add>, %278, %cst_122 [1] : vector<3x4xf32> to vector<3xf32>
    %280 = vector.shape_cast %279 : vector<3xf32> to vector<3x1xf32>
    %cst_123 = arith.constant 4.000000e+00 : f32
    %281 = vector.broadcast %cst_123 : f32 to vector<3x1xf32>
    %282 = arith.divf %280, %281 : vector<3x1xf32>
    %283 = vector.broadcast %282 : vector<3x1xf32> to vector<3x4xf32>
    %284 = arith.subf %278, %283 : vector<3x4xf32>
    %285 = arith.mulf %284, %284 : vector<3x4xf32>
    %cst_124 = arith.constant dense<0.000000e+00> : vector<3xf32>
    %286 = vector.multi_reduction <add>, %285, %cst_124 [1] : vector<3x4xf32> to vector<3xf32>
    %287 = vector.shape_cast %286 : vector<3xf32> to vector<3x1xf32>
    %cst_125 = arith.constant 4.000000e+00 : f32
    %288 = vector.broadcast %cst_125 : f32 to vector<3x1xf32>
    %289 = arith.divf %287, %288 : vector<3x1xf32>
    %cst_126 = arith.constant 9.99999974E-6 : f32
    %290 = vector.broadcast %cst_126 : f32 to vector<3x1xf32>
    %291 = arith.addf %289, %290 : vector<3x1xf32>
    %292 = math.rsqrt %291 : vector<3x1xf32>
    %293 = vector.broadcast %292 : vector<3x1xf32> to vector<3x4xf32>
    %294 = arith.mulf %284, %293 : vector<3x4xf32>
    %295 = vector.extract_strided_slice %73 {offsets = [1, 0], sizes = [1, 4], strides = [1, 1]} : vector<4x4xf32> to vector<1x4xf32>
    %296 = vector.broadcast %295 : vector<1x4xf32> to vector<3x4xf32>
    %297 = arith.mulf %294, %296 : vector<3x4xf32>
    %298 = vector.extract_strided_slice %74 {offsets = [1, 0], sizes = [1, 4], strides = [1, 1]} : vector<4x4xf32> to vector<1x4xf32>
    %299 = vector.broadcast %298 : vector<1x4xf32> to vector<3x4xf32>
    %300 = arith.addf %297, %299 : vector<3x4xf32>
    %cst_127 = arith.constant 0.000000e+00 : f32
    %301 = vector.broadcast %cst_127 : f32 to vector<3x4xf32>
    %302 = arith.maximumf %300, %301 : vector<3x4xf32>
    %c1_128 = arith.constant 1 : index
    %c0_129 = arith.constant 0 : index
    %c0_130 = arith.constant 0 : index
    %303 = vector.load %arg9[%c1_128, %c0_129, %c0_130] : memref<4x4x16xf32, #tpu.memory_space<vmem>>, vector<1x4x16xf32>
    %304 = vector.shape_cast %303 : vector<1x4x16xf32> to vector<4x16xf32>
    %cst_131 = arith.constant dense<0.000000e+00> : vector<3x16xf32>
    %305 = tpu.matmul %302, %304, %cst_131 {dimension_numbers = #tpu.dot_dimension_numbers<[1], [0], [0], [1], [0, 0, 1, 1], [], []>} : vector<3x4xf32>, vector<4x16xf32>, vector<3x16xf32> -> vector<3x16xf32>
    %306 = vector.extract_strided_slice %75 {offsets = [1, 0], sizes = [1, 16], strides = [1, 1]} : vector<4x16xf32> to vector<1x16xf32>
    %307 = vector.broadcast %306 : vector<1x16xf32> to vector<3x16xf32>
    %308 = arith.addf %305, %307 : vector<3x16xf32>
    %cst_132 = arith.constant dense<0.000000e+00> : vector<3xf32>
    %309 = vector.multi_reduction <add>, %308, %cst_132 [1] : vector<3x16xf32> to vector<3xf32>
    %310 = vector.shape_cast %309 : vector<3xf32> to vector<3x1xf32>
    %cst_133 = arith.constant 1.600000e+01 : f32
    %311 = vector.broadcast %cst_133 : f32 to vector<3x1xf32>
    %312 = arith.divf %310, %311 : vector<3x1xf32>
    %313 = vector.broadcast %312 : vector<3x1xf32> to vector<3x16xf32>
    %314 = arith.subf %308, %313 : vector<3x16xf32>
    %315 = arith.mulf %314, %314 : vector<3x16xf32>
    %cst_134 = arith.constant dense<0.000000e+00> : vector<3xf32>
    %316 = vector.multi_reduction <add>, %315, %cst_134 [1] : vector<3x16xf32> to vector<3xf32>
    %317 = vector.shape_cast %316 : vector<3xf32> to vector<3x1xf32>
    %cst_135 = arith.constant 1.600000e+01 : f32
    %318 = vector.broadcast %cst_135 : f32 to vector<3x1xf32>
    %319 = arith.divf %317, %318 : vector<3x1xf32>
    %cst_136 = arith.constant 9.99999974E-6 : f32
    %320 = vector.broadcast %cst_136 : f32 to vector<3x1xf32>
    %321 = arith.addf %319, %320 : vector<3x1xf32>
    %322 = math.rsqrt %321 : vector<3x1xf32>
    %323 = vector.broadcast %322 : vector<3x1xf32> to vector<3x16xf32>
    %324 = arith.mulf %314, %323 : vector<3x16xf32>
    %325 = vector.extract_strided_slice %76 {offsets = [1, 0], sizes = [1, 16], strides = [1, 1]} : vector<4x16xf32> to vector<1x16xf32>
    %326 = vector.broadcast %325 : vector<1x16xf32> to vector<3x16xf32>
    %327 = arith.mulf %324, %326 : vector<3x16xf32>
    %328 = vector.extract_strided_slice %77 {offsets = [1, 0], sizes = [1, 16], strides = [1, 1]} : vector<4x16xf32> to vector<1x16xf32>
    %329 = vector.broadcast %328 : vector<1x16xf32> to vector<3x16xf32>
    %330 = arith.addf %327, %329 : vector<3x16xf32>
    %331 = arith.negf %330 : vector<3x16xf32>
    %332 = math.exp %331 : vector<3x16xf32>
    %cst_137 = arith.constant 1.000000e+00 : f32
    %333 = vector.broadcast %cst_137 : f32 to vector<3x16xf32>
    %334 = arith.addf %333, %332 : vector<3x16xf32>
    %335 = arith.divf %333, %334 : vector<3x16xf32>
    %336 = arith.addf %272, %335 : vector<3x16xf32>
    %337 = vector.extract_strided_slice %71 {offsets = [0, 1], sizes = [3, 1], strides = [1, 1]} : vector<3x4xf32> to vector<3x1xf32>
    %338 = vector.broadcast %337 : vector<3x1xf32> to vector<3x16xf32>
    %339 = arith.mulf %336, %338 : vector<3x16xf32>
    %340 = arith.addf %209, %339 : vector<3x16xf32>
    %c2_138 = arith.constant 2 : index
    %c0_139 = arith.constant 0 : index
    %c0_140 = arith.constant 0 : index
    %341 = vector.load %arg5[%c2_138, %c0_139, %c0_140] : memref<4x16x4xf32, #tpu.memory_space<vmem>>, vector<1x16x4xf32>
    %342 = vector.shape_cast %341 : vector<1x16x4xf32> to vector<16x4xf32>
    %cst_141 = arith.constant dense<0.000000e+00> : vector<3x4xf32>
    %343 = tpu.matmul %3, %342, %cst_141 {dimension_numbers = #tpu.dot_dimension_numbers<[1], [0], [0], [1], [0, 0, 1, 1], [], []>} : vector<3x16xf32>, vector<16x4xf32>, vector<3x4xf32> -> vector<3x4xf32>
    %344 = vector.extract_strided_slice %72 {offsets = [2, 0], sizes = [1, 4], strides = [1, 1]} : vector<4x4xf32> to vector<1x4xf32>
    %345 = vector.broadcast %344 : vector<1x4xf32> to vector<3x4xf32>
    %346 = arith.addf %343, %345 : vector<3x4xf32>
    %cst_142 = arith.constant dense<0.000000e+00> : vector<3xf32>
    %347 = vector.multi_reduction <add>, %346, %cst_142 [1] : vector<3x4xf32> to vector<3xf32>
    %348 = vector.shape_cast %347 : vector<3xf32> to vector<3x1xf32>
    %cst_143 = arith.constant 4.000000e+00 : f32
    %349 = vector.broadcast %cst_143 : f32 to vector<3x1xf32>
    %350 = arith.divf %348, %349 : vector<3x1xf32>
    %351 = vector.broadcast %350 : vector<3x1xf32> to vector<3x4xf32>
    %352 = arith.subf %346, %351 : vector<3x4xf32>
    %353 = arith.mulf %352, %352 : vector<3x4xf32>
    %cst_144 = arith.constant dense<0.000000e+00> : vector<3xf32>
    %354 = vector.multi_reduction <add>, %353, %cst_144 [1] : vector<3x4xf32> to vector<3xf32>
    %355 = vector.shape_cast %354 : vector<3xf32> to vector<3x1xf32>
    %cst_145 = arith.constant 4.000000e+00 : f32
    %356 = vector.broadcast %cst_145 : f32 to vector<3x1xf32>
    %357 = arith.divf %355, %356 : vector<3x1xf32>
    %cst_146 = arith.constant 9.99999974E-6 : f32
    %358 = vector.broadcast %cst_146 : f32 to vector<3x1xf32>
    %359 = arith.addf %357, %358 : vector<3x1xf32>
    %360 = math.rsqrt %359 : vector<3x1xf32>
    %361 = vector.broadcast %360 : vector<3x1xf32> to vector<3x4xf32>
    %362 = arith.mulf %352, %361 : vector<3x4xf32>
    %363 = vector.extract_strided_slice %73 {offsets = [2, 0], sizes = [1, 4], strides = [1, 1]} : vector<4x4xf32> to vector<1x4xf32>
    %364 = vector.broadcast %363 : vector<1x4xf32> to vector<3x4xf32>
    %365 = arith.mulf %362, %364 : vector<3x4xf32>
    %366 = vector.extract_strided_slice %74 {offsets = [2, 0], sizes = [1, 4], strides = [1, 1]} : vector<4x4xf32> to vector<1x4xf32>
    %367 = vector.broadcast %366 : vector<1x4xf32> to vector<3x4xf32>
    %368 = arith.addf %365, %367 : vector<3x4xf32>
    %cst_147 = arith.constant 0.000000e+00 : f32
    %369 = vector.broadcast %cst_147 : f32 to vector<3x4xf32>
    %370 = arith.maximumf %368, %369 : vector<3x4xf32>
    %c2_148 = arith.constant 2 : index
    %c0_149 = arith.constant 0 : index
    %c0_150 = arith.constant 0 : index
    %371 = vector.load %arg9[%c2_148, %c0_149, %c0_150] : memref<4x4x16xf32, #tpu.memory_space<vmem>>, vector<1x4x16xf32>
    %372 = vector.shape_cast %371 : vector<1x4x16xf32> to vector<4x16xf32>
    %cst_151 = arith.constant dense<0.000000e+00> : vector<3x16xf32>
    %373 = tpu.matmul %370, %372, %cst_151 {dimension_numbers = #tpu.dot_dimension_numbers<[1], [0], [0], [1], [0, 0, 1, 1], [], []>} : vector<3x4xf32>, vector<4x16xf32>, vector<3x16xf32> -> vector<3x16xf32>
    %374 = vector.extract_strided_slice %75 {offsets = [2, 0], sizes = [1, 16], strides = [1, 1]} : vector<4x16xf32> to vector<1x16xf32>
    %375 = vector.broadcast %374 : vector<1x16xf32> to vector<3x16xf32>
    %376 = arith.addf %373, %375 : vector<3x16xf32>
    %cst_152 = arith.constant dense<0.000000e+00> : vector<3xf32>
    %377 = vector.multi_reduction <add>, %376, %cst_152 [1] : vector<3x16xf32> to vector<3xf32>
    %378 = vector.shape_cast %377 : vector<3xf32> to vector<3x1xf32>
    %cst_153 = arith.constant 1.600000e+01 : f32
    %379 = vector.broadcast %cst_153 : f32 to vector<3x1xf32>
    %380 = arith.divf %378, %379 : vector<3x1xf32>
    %381 = vector.broadcast %380 : vector<3x1xf32> to vector<3x16xf32>
    %382 = arith.subf %376, %381 : vector<3x16xf32>
    %383 = arith.mulf %382, %382 : vector<3x16xf32>
    %cst_154 = arith.constant dense<0.000000e+00> : vector<3xf32>
    %384 = vector.multi_reduction <add>, %383, %cst_154 [1] : vector<3x16xf32> to vector<3xf32>
    %385 = vector.shape_cast %384 : vector<3xf32> to vector<3x1xf32>
    %cst_155 = arith.constant 1.600000e+01 : f32
    %386 = vector.broadcast %cst_155 : f32 to vector<3x1xf32>
    %387 = arith.divf %385, %386 : vector<3x1xf32>
    %cst_156 = arith.constant 9.99999974E-6 : f32
    %388 = vector.broadcast %cst_156 : f32 to vector<3x1xf32>
    %389 = arith.addf %387, %388 : vector<3x1xf32>
    %390 = math.rsqrt %389 : vector<3x1xf32>
    %391 = vector.broadcast %390 : vector<3x1xf32> to vector<3x16xf32>
    %392 = arith.mulf %382, %391 : vector<3x16xf32>
    %393 = vector.extract_strided_slice %76 {offsets = [2, 0], sizes = [1, 16], strides = [1, 1]} : vector<4x16xf32> to vector<1x16xf32>
    %394 = vector.broadcast %393 : vector<1x16xf32> to vector<3x16xf32>
    %395 = arith.mulf %392, %394 : vector<3x16xf32>
    %396 = vector.extract_strided_slice %77 {offsets = [2, 0], sizes = [1, 16], strides = [1, 1]} : vector<4x16xf32> to vector<1x16xf32>
    %397 = vector.broadcast %396 : vector<1x16xf32> to vector<3x16xf32>
    %398 = arith.addf %395, %397 : vector<3x16xf32>
    %399 = arith.negf %398 : vector<3x16xf32>
    %400 = math.exp %399 : vector<3x16xf32>
    %cst_157 = arith.constant 1.000000e+00 : f32
    %401 = vector.broadcast %cst_157 : f32 to vector<3x16xf32>
    %402 = arith.addf %401, %400 : vector<3x16xf32>
    %403 = arith.divf %401, %402 : vector<3x16xf32>
    %c2_158 = arith.constant 2 : index
    %c0_159 = arith.constant 0 : index
    %c0_160 = arith.constant 0 : index
    %404 = vector.load %arg5[%c2_158, %c0_159, %c0_160] : memref<4x16x4xf32, #tpu.memory_space<vmem>>, vector<1x16x4xf32>
    %405 = vector.shape_cast %404 : vector<1x16x4xf32> to vector<16x4xf32>
    %cst_161 = arith.constant dense<0.000000e+00> : vector<3x4xf32>
    %406 = tpu.matmul %5, %405, %cst_161 {dimension_numbers = #tpu.dot_dimension_numbers<[1], [0], [0], [1], [0, 0, 1, 1], [], []>} : vector<3x16xf32>, vector<16x4xf32>, vector<3x4xf32> -> vector<3x4xf32>
    %407 = vector.extract_strided_slice %72 {offsets = [2, 0], sizes = [1, 4], strides = [1, 1]} : vector<4x4xf32> to vector<1x4xf32>
    %408 = vector.broadcast %407 : vector<1x4xf32> to vector<3x4xf32>
    %409 = arith.addf %406, %408 : vector<3x4xf32>
    %cst_162 = arith.constant dense<0.000000e+00> : vector<3xf32>
    %410 = vector.multi_reduction <add>, %409, %cst_162 [1] : vector<3x4xf32> to vector<3xf32>
    %411 = vector.shape_cast %410 : vector<3xf32> to vector<3x1xf32>
    %cst_163 = arith.constant 4.000000e+00 : f32
    %412 = vector.broadcast %cst_163 : f32 to vector<3x1xf32>
    %413 = arith.divf %411, %412 : vector<3x1xf32>
    %414 = vector.broadcast %413 : vector<3x1xf32> to vector<3x4xf32>
    %415 = arith.subf %409, %414 : vector<3x4xf32>
    %416 = arith.mulf %415, %415 : vector<3x4xf32>
    %cst_164 = arith.constant dense<0.000000e+00> : vector<3xf32>
    %417 = vector.multi_reduction <add>, %416, %cst_164 [1] : vector<3x4xf32> to vector<3xf32>
    %418 = vector.shape_cast %417 : vector<3xf32> to vector<3x1xf32>
    %cst_165 = arith.constant 4.000000e+00 : f32
    %419 = vector.broadcast %cst_165 : f32 to vector<3x1xf32>
    %420 = arith.divf %418, %419 : vector<3x1xf32>
    %cst_166 = arith.constant 9.99999974E-6 : f32
    %421 = vector.broadcast %cst_166 : f32 to vector<3x1xf32>
    %422 = arith.addf %420, %421 : vector<3x1xf32>
    %423 = math.rsqrt %422 : vector<3x1xf32>
    %424 = vector.broadcast %423 : vector<3x1xf32> to vector<3x4xf32>
    %425 = arith.mulf %415, %424 : vector<3x4xf32>
    %426 = vector.extract_strided_slice %73 {offsets = [2, 0], sizes = [1, 4], strides = [1, 1]} : vector<4x4xf32> to vector<1x4xf32>
    %427 = vector.broadcast %426 : vector<1x4xf32> to vector<3x4xf32>
    %428 = arith.mulf %425, %427 : vector<3x4xf32>
    %429 = vector.extract_strided_slice %74 {offsets = [2, 0], sizes = [1, 4], strides = [1, 1]} : vector<4x4xf32> to vector<1x4xf32>
    %430 = vector.broadcast %429 : vector<1x4xf32> to vector<3x4xf32>
    %431 = arith.addf %428, %430 : vector<3x4xf32>
    %cst_167 = arith.constant 0.000000e+00 : f32
    %432 = vector.broadcast %cst_167 : f32 to vector<3x4xf32>
    %433 = arith.maximumf %431, %432 : vector<3x4xf32>
    %c2_168 = arith.constant 2 : index
    %c0_169 = arith.constant 0 : index
    %c0_170 = arith.constant 0 : index
    %434 = vector.load %arg9[%c2_168, %c0_169, %c0_170] : memref<4x4x16xf32, #tpu.memory_space<vmem>>, vector<1x4x16xf32>
    %435 = vector.shape_cast %434 : vector<1x4x16xf32> to vector<4x16xf32>
    %cst_171 = arith.constant dense<0.000000e+00> : vector<3x16xf32>
    %436 = tpu.matmul %433, %435, %cst_171 {dimension_numbers = #tpu.dot_dimension_numbers<[1], [0], [0], [1], [0, 0, 1, 1], [], []>} : vector<3x4xf32>, vector<4x16xf32>, vector<3x16xf32> -> vector<3x16xf32>
    %437 = vector.extract_strided_slice %75 {offsets = [2, 0], sizes = [1, 16], strides = [1, 1]} : vector<4x16xf32> to vector<1x16xf32>
    %438 = vector.broadcast %437 : vector<1x16xf32> to vector<3x16xf32>
    %439 = arith.addf %436, %438 : vector<3x16xf32>
    %cst_172 = arith.constant dense<0.000000e+00> : vector<3xf32>
    %440 = vector.multi_reduction <add>, %439, %cst_172 [1] : vector<3x16xf32> to vector<3xf32>
    %441 = vector.shape_cast %440 : vector<3xf32> to vector<3x1xf32>
    %cst_173 = arith.constant 1.600000e+01 : f32
    %442 = vector.broadcast %cst_173 : f32 to vector<3x1xf32>
    %443 = arith.divf %441, %442 : vector<3x1xf32>
    %444 = vector.broadcast %443 : vector<3x1xf32> to vector<3x16xf32>
    %445 = arith.subf %439, %444 : vector<3x16xf32>
    %446 = arith.mulf %445, %445 : vector<3x16xf32>
    %cst_174 = arith.constant dense<0.000000e+00> : vector<3xf32>
    %447 = vector.multi_reduction <add>, %446, %cst_174 [1] : vector<3x16xf32> to vector<3xf32>
    %448 = vector.shape_cast %447 : vector<3xf32> to vector<3x1xf32>
    %cst_175 = arith.constant 1.600000e+01 : f32
    %449 = vector.broadcast %cst_175 : f32 to vector<3x1xf32>
    %450 = arith.divf %448, %449 : vector<3x1xf32>
    %cst_176 = arith.constant 9.99999974E-6 : f32
    %451 = vector.broadcast %cst_176 : f32 to vector<3x1xf32>
    %452 = arith.addf %450, %451 : vector<3x1xf32>
    %453 = math.rsqrt %452 : vector<3x1xf32>
    %454 = vector.broadcast %453 : vector<3x1xf32> to vector<3x16xf32>
    %455 = arith.mulf %445, %454 : vector<3x16xf32>
    %456 = vector.extract_strided_slice %76 {offsets = [2, 0], sizes = [1, 16], strides = [1, 1]} : vector<4x16xf32> to vector<1x16xf32>
    %457 = vector.broadcast %456 : vector<1x16xf32> to vector<3x16xf32>
    %458 = arith.mulf %455, %457 : vector<3x16xf32>
    %459 = vector.extract_strided_slice %77 {offsets = [2, 0], sizes = [1, 16], strides = [1, 1]} : vector<4x16xf32> to vector<1x16xf32>
    %460 = vector.broadcast %459 : vector<1x16xf32> to vector<3x16xf32>
    %461 = arith.addf %458, %460 : vector<3x16xf32>
    %462 = arith.negf %461 : vector<3x16xf32>
    %463 = math.exp %462 : vector<3x16xf32>
    %cst_177 = arith.constant 1.000000e+00 : f32
    %464 = vector.broadcast %cst_177 : f32 to vector<3x16xf32>
    %465 = arith.addf %464, %463 : vector<3x16xf32>
    %466 = arith.divf %464, %465 : vector<3x16xf32>
    %467 = arith.addf %403, %466 : vector<3x16xf32>
    %468 = vector.extract_strided_slice %71 {offsets = [0, 2], sizes = [3, 1], strides = [1, 1]} : vector<3x4xf32> to vector<3x1xf32>
    %469 = vector.broadcast %468 : vector<3x1xf32> to vector<3x16xf32>
    %470 = arith.mulf %467, %469 : vector<3x16xf32>
    %471 = arith.addf %340, %470 : vector<3x16xf32>
    %c3 = arith.constant 3 : index
    %c0_178 = arith.constant 0 : index
    %c0_179 = arith.constant 0 : index
    %472 = vector.load %arg5[%c3, %c0_178, %c0_179] : memref<4x16x4xf32, #tpu.memory_space<vmem>>, vector<1x16x4xf32>
    %473 = vector.shape_cast %472 : vector<1x16x4xf32> to vector<16x4xf32>
    %cst_180 = arith.constant dense<0.000000e+00> : vector<3x4xf32>
    %474 = tpu.matmul %3, %473, %cst_180 {dimension_numbers = #tpu.dot_dimension_numbers<[1], [0], [0], [1], [0, 0, 1, 1], [], []>} : vector<3x16xf32>, vector<16x4xf32>, vector<3x4xf32> -> vector<3x4xf32>
    %475 = vector.extract_strided_slice %72 {offsets = [3, 0], sizes = [1, 4], strides = [1, 1]} : vector<4x4xf32> to vector<1x4xf32>
    %476 = vector.broadcast %475 : vector<1x4xf32> to vector<3x4xf32>
    %477 = arith.addf %474, %476 : vector<3x4xf32>
    %cst_181 = arith.constant dense<0.000000e+00> : vector<3xf32>
    %478 = vector.multi_reduction <add>, %477, %cst_181 [1] : vector<3x4xf32> to vector<3xf32>
    %479 = vector.shape_cast %478 : vector<3xf32> to vector<3x1xf32>
    %cst_182 = arith.constant 4.000000e+00 : f32
    %480 = vector.broadcast %cst_182 : f32 to vector<3x1xf32>
    %481 = arith.divf %479, %480 : vector<3x1xf32>
    %482 = vector.broadcast %481 : vector<3x1xf32> to vector<3x4xf32>
    %483 = arith.subf %477, %482 : vector<3x4xf32>
    %484 = arith.mulf %483, %483 : vector<3x4xf32>
    %cst_183 = arith.constant dense<0.000000e+00> : vector<3xf32>
    %485 = vector.multi_reduction <add>, %484, %cst_183 [1] : vector<3x4xf32> to vector<3xf32>
    %486 = vector.shape_cast %485 : vector<3xf32> to vector<3x1xf32>
    %cst_184 = arith.constant 4.000000e+00 : f32
    %487 = vector.broadcast %cst_184 : f32 to vector<3x1xf32>
    %488 = arith.divf %486, %487 : vector<3x1xf32>
    %cst_185 = arith.constant 9.99999974E-6 : f32
    %489 = vector.broadcast %cst_185 : f32 to vector<3x1xf32>
    %490 = arith.addf %488, %489 : vector<3x1xf32>
    %491 = math.rsqrt %490 : vector<3x1xf32>
    %492 = vector.broadcast %491 : vector<3x1xf32> to vector<3x4xf32>
    %493 = arith.mulf %483, %492 : vector<3x4xf32>
    %494 = vector.extract_strided_slice %73 {offsets = [3, 0], sizes = [1, 4], strides = [1, 1]} : vector<4x4xf32> to vector<1x4xf32>
    %495 = vector.broadcast %494 : vector<1x4xf32> to vector<3x4xf32>
    %496 = arith.mulf %493, %495 : vector<3x4xf32>
    %497 = vector.extract_strided_slice %74 {offsets = [3, 0], sizes = [1, 4], strides = [1, 1]} : vector<4x4xf32> to vector<1x4xf32>
    %498 = vector.broadcast %497 : vector<1x4xf32> to vector<3x4xf32>
    %499 = arith.addf %496, %498 : vector<3x4xf32>
    %cst_186 = arith.constant 0.000000e+00 : f32
    %500 = vector.broadcast %cst_186 : f32 to vector<3x4xf32>
    %501 = arith.maximumf %499, %500 : vector<3x4xf32>
    %c3_187 = arith.constant 3 : index
    %c0_188 = arith.constant 0 : index
    %c0_189 = arith.constant 0 : index
    %502 = vector.load %arg9[%c3_187, %c0_188, %c0_189] : memref<4x4x16xf32, #tpu.memory_space<vmem>>, vector<1x4x16xf32>
    %503 = vector.shape_cast %502 : vector<1x4x16xf32> to vector<4x16xf32>
    %cst_190 = arith.constant dense<0.000000e+00> : vector<3x16xf32>
    %504 = tpu.matmul %501, %503, %cst_190 {dimension_numbers = #tpu.dot_dimension_numbers<[1], [0], [0], [1], [0, 0, 1, 1], [], []>} : vector<3x4xf32>, vector<4x16xf32>, vector<3x16xf32> -> vector<3x16xf32>
    %505 = vector.extract_strided_slice %75 {offsets = [3, 0], sizes = [1, 16], strides = [1, 1]} : vector<4x16xf32> to vector<1x16xf32>
    %506 = vector.broadcast %505 : vector<1x16xf32> to vector<3x16xf32>
    %507 = arith.addf %504, %506 : vector<3x16xf32>
    %cst_191 = arith.constant dense<0.000000e+00> : vector<3xf32>
    %508 = vector.multi_reduction <add>, %507, %cst_191 [1] : vector<3x16xf32> to vector<3xf32>
    %509 = vector.shape_cast %508 : vector<3xf32> to vector<3x1xf32>
    %cst_192 = arith.constant 1.600000e+01 : f32
    %510 = vector.broadcast %cst_192 : f32 to vector<3x1xf32>
    %511 = arith.divf %509, %510 : vector<3x1xf32>
    %512 = vector.broadcast %511 : vector<3x1xf32> to vector<3x16xf32>
    %513 = arith.subf %507, %512 : vector<3x16xf32>
    %514 = arith.mulf %513, %513 : vector<3x16xf32>
    %cst_193 = arith.constant dense<0.000000e+00> : vector<3xf32>
    %515 = vector.multi_reduction <add>, %514, %cst_193 [1] : vector<3x16xf32> to vector<3xf32>
    %516 = vector.shape_cast %515 : vector<3xf32> to vector<3x1xf32>
    %cst_194 = arith.constant 1.600000e+01 : f32
    %517 = vector.broadcast %cst_194 : f32 to vector<3x1xf32>
    %518 = arith.divf %516, %517 : vector<3x1xf32>
    %cst_195 = arith.constant 9.99999974E-6 : f32
    %519 = vector.broadcast %cst_195 : f32 to vector<3x1xf32>
    %520 = arith.addf %518, %519 : vector<3x1xf32>
    %521 = math.rsqrt %520 : vector<3x1xf32>
    %522 = vector.broadcast %521 : vector<3x1xf32> to vector<3x16xf32>
    %523 = arith.mulf %513, %522 : vector<3x16xf32>
    %524 = vector.extract_strided_slice %76 {offsets = [3, 0], sizes = [1, 16], strides = [1, 1]} : vector<4x16xf32> to vector<1x16xf32>
    %525 = vector.broadcast %524 : vector<1x16xf32> to vector<3x16xf32>
    %526 = arith.mulf %523, %525 : vector<3x16xf32>
    %527 = vector.extract_strided_slice %77 {offsets = [3, 0], sizes = [1, 16], strides = [1, 1]} : vector<4x16xf32> to vector<1x16xf32>
    %528 = vector.broadcast %527 : vector<1x16xf32> to vector<3x16xf32>
    %529 = arith.addf %526, %528 : vector<3x16xf32>
    %530 = arith.negf %529 : vector<3x16xf32>
    %531 = math.exp %530 : vector<3x16xf32>
    %cst_196 = arith.constant 1.000000e+00 : f32
    %532 = vector.broadcast %cst_196 : f32 to vector<3x16xf32>
    %533 = arith.addf %532, %531 : vector<3x16xf32>
    %534 = arith.divf %532, %533 : vector<3x16xf32>
    %c3_197 = arith.constant 3 : index
    %c0_198 = arith.constant 0 : index
    %c0_199 = arith.constant 0 : index
    %535 = vector.load %arg5[%c3_197, %c0_198, %c0_199] : memref<4x16x4xf32, #tpu.memory_space<vmem>>, vector<1x16x4xf32>
    %536 = vector.shape_cast %535 : vector<1x16x4xf32> to vector<16x4xf32>
    %cst_200 = arith.constant dense<0.000000e+00> : vector<3x4xf32>
    %537 = tpu.matmul %5, %536, %cst_200 {dimension_numbers = #tpu.dot_dimension_numbers<[1], [0], [0], [1], [0, 0, 1, 1], [], []>} : vector<3x16xf32>, vector<16x4xf32>, vector<3x4xf32> -> vector<3x4xf32>
    %538 = vector.extract_strided_slice %72 {offsets = [3, 0], sizes = [1, 4], strides = [1, 1]} : vector<4x4xf32> to vector<1x4xf32>
    %539 = vector.broadcast %538 : vector<1x4xf32> to vector<3x4xf32>
    %540 = arith.addf %537, %539 : vector<3x4xf32>
    %cst_201 = arith.constant dense<0.000000e+00> : vector<3xf32>
    %541 = vector.multi_reduction <add>, %540, %cst_201 [1] : vector<3x4xf32> to vector<3xf32>
    %542 = vector.shape_cast %541 : vector<3xf32> to vector<3x1xf32>
    %cst_202 = arith.constant 4.000000e+00 : f32
    %543 = vector.broadcast %cst_202 : f32 to vector<3x1xf32>
    %544 = arith.divf %542, %543 : vector<3x1xf32>
    %545 = vector.broadcast %544 : vector<3x1xf32> to vector<3x4xf32>
    %546 = arith.subf %540, %545 : vector<3x4xf32>
    %547 = arith.mulf %546, %546 : vector<3x4xf32>
    %cst_203 = arith.constant dense<0.000000e+00> : vector<3xf32>
    %548 = vector.multi_reduction <add>, %547, %cst_203 [1] : vector<3x4xf32> to vector<3xf32>
    %549 = vector.shape_cast %548 : vector<3xf32> to vector<3x1xf32>
    %cst_204 = arith.constant 4.000000e+00 : f32
    %550 = vector.broadcast %cst_204 : f32 to vector<3x1xf32>
    %551 = arith.divf %549, %550 : vector<3x1xf32>
    %cst_205 = arith.constant 9.99999974E-6 : f32
    %552 = vector.broadcast %cst_205 : f32 to vector<3x1xf32>
    %553 = arith.addf %551, %552 : vector<3x1xf32>
    %554 = math.rsqrt %553 : vector<3x1xf32>
    %555 = vector.broadcast %554 : vector<3x1xf32> to vector<3x4xf32>
    %556 = arith.mulf %546, %555 : vector<3x4xf32>
    %557 = vector.extract_strided_slice %73 {offsets = [3, 0], sizes = [1, 4], strides = [1, 1]} : vector<4x4xf32> to vector<1x4xf32>
    %558 = vector.broadcast %557 : vector<1x4xf32> to vector<3x4xf32>
    %559 = arith.mulf %556, %558 : vector<3x4xf32>
    %560 = vector.extract_strided_slice %74 {offsets = [3, 0], sizes = [1, 4], strides = [1, 1]} : vector<4x4xf32> to vector<1x4xf32>
    %561 = vector.broadcast %560 : vector<1x4xf32> to vector<3x4xf32>
    %562 = arith.addf %559, %561 : vector<3x4xf32>
    %cst_206 = arith.constant 0.000000e+00 : f32
    %563 = vector.broadcast %cst_206 : f32 to vector<3x4xf32>
    %564 = arith.maximumf %562, %563 : vector<3x4xf32>
    %c3_207 = arith.constant 3 : index
    %c0_208 = arith.constant 0 : index
    %c0_209 = arith.constant 0 : index
    %565 = vector.load %arg9[%c3_207, %c0_208, %c0_209] : memref<4x4x16xf32, #tpu.memory_space<vmem>>, vector<1x4x16xf32>
    %566 = vector.shape_cast %565 : vector<1x4x16xf32> to vector<4x16xf32>
    %cst_210 = arith.constant dense<0.000000e+00> : vector<3x16xf32>
    %567 = tpu.matmul %564, %566, %cst_210 {dimension_numbers = #tpu.dot_dimension_numbers<[1], [0], [0], [1], [0, 0, 1, 1], [], []>} : vector<3x4xf32>, vector<4x16xf32>, vector<3x16xf32> -> vector<3x16xf32>
    %568 = vector.extract_strided_slice %75 {offsets = [3, 0], sizes = [1, 16], strides = [1, 1]} : vector<4x16xf32> to vector<1x16xf32>
    %569 = vector.broadcast %568 : vector<1x16xf32> to vector<3x16xf32>
    %570 = arith.addf %567, %569 : vector<3x16xf32>
    %cst_211 = arith.constant dense<0.000000e+00> : vector<3xf32>
    %571 = vector.multi_reduction <add>, %570, %cst_211 [1] : vector<3x16xf32> to vector<3xf32>
    %572 = vector.shape_cast %571 : vector<3xf32> to vector<3x1xf32>
    %cst_212 = arith.constant 1.600000e+01 : f32
    %573 = vector.broadcast %cst_212 : f32 to vector<3x1xf32>
    %574 = arith.divf %572, %573 : vector<3x1xf32>
    %575 = vector.broadcast %574 : vector<3x1xf32> to vector<3x16xf32>
    %576 = arith.subf %570, %575 : vector<3x16xf32>
    %577 = arith.mulf %576, %576 : vector<3x16xf32>
    %cst_213 = arith.constant dense<0.000000e+00> : vector<3xf32>
    %578 = vector.multi_reduction <add>, %577, %cst_213 [1] : vector<3x16xf32> to vector<3xf32>
    %579 = vector.shape_cast %578 : vector<3xf32> to vector<3x1xf32>
    %cst_214 = arith.constant 1.600000e+01 : f32
    %580 = vector.broadcast %cst_214 : f32 to vector<3x1xf32>
    %581 = arith.divf %579, %580 : vector<3x1xf32>
    %cst_215 = arith.constant 9.99999974E-6 : f32
    %582 = vector.broadcast %cst_215 : f32 to vector<3x1xf32>
    %583 = arith.addf %581, %582 : vector<3x1xf32>
    %584 = math.rsqrt %583 : vector<3x1xf32>
    %585 = vector.broadcast %584 : vector<3x1xf32> to vector<3x16xf32>
    %586 = arith.mulf %576, %585 : vector<3x16xf32>
    %587 = vector.extract_strided_slice %76 {offsets = [3, 0], sizes = [1, 16], strides = [1, 1]} : vector<4x16xf32> to vector<1x16xf32>
    %588 = vector.broadcast %587 : vector<1x16xf32> to vector<3x16xf32>
    %589 = arith.mulf %586, %588 : vector<3x16xf32>
    %590 = vector.extract_strided_slice %77 {offsets = [3, 0], sizes = [1, 16], strides = [1, 1]} : vector<4x16xf32> to vector<1x16xf32>
    %591 = vector.broadcast %590 : vector<1x16xf32> to vector<3x16xf32>
    %592 = arith.addf %589, %591 : vector<3x16xf32>
    %593 = arith.negf %592 : vector<3x16xf32>
    %594 = math.exp %593 : vector<3x16xf32>
    %cst_216 = arith.constant 1.000000e+00 : f32
    %595 = vector.broadcast %cst_216 : f32 to vector<3x16xf32>
    %596 = arith.addf %595, %594 : vector<3x16xf32>
    %597 = arith.divf %595, %596 : vector<3x16xf32>
    %598 = arith.addf %534, %597 : vector<3x16xf32>
    %599 = vector.extract_strided_slice %71 {offsets = [0, 3], sizes = [3, 1], strides = [1, 1]} : vector<3x4xf32> to vector<3x1xf32>
    %600 = vector.broadcast %599 : vector<3x1xf32> to vector<3x16xf32>
    %601 = arith.mulf %598, %600 : vector<3x16xf32>
    %602 = arith.addf %471, %601 : vector<3x16xf32>
    %603 = arith.negf %602 : vector<3x16xf32>
    %604 = math.exp %603 : vector<3x16xf32>
    %cst_217 = arith.constant 1.000000e+00 : f32
    %605 = vector.broadcast %cst_217 : f32 to vector<3x16xf32>
    %606 = arith.addf %605, %604 : vector<3x16xf32>
    %607 = arith.divf %605, %606 : vector<3x16xf32>
    %cst_218 = arith.constant 1.000000e+00 : f32
    %608 = vector.broadcast %cst_218 : f32 to vector<3x16xf32>
    %609 = arith.addf %607, %608 : vector<3x16xf32>
    %610 = vector.shape_cast %609 : vector<3x16xf32> to vector<3x16x1xf32>
    %c0_219 = arith.constant 0 : index
    %c0_220 = arith.constant 0 : index
    %c0_221 = arith.constant 0 : index
    %611 = vector.load %arg1[%c0_219, %c0_220, %c0_221] : memref<3x16x144xf32, #tpu.memory_space<vmem>>, vector<3x16x144xf32>
    %612 = vector.broadcast %610 : vector<3x16x1xf32> to vector<3x16x144xf32>
    %613 = arith.mulf %611, %612 : vector<3x16x144xf32>
    %c0_222 = arith.constant 0 : index
    %c0_223 = arith.constant 0 : index
    %c0_224 = arith.constant 0 : index
    %614 = vector.load %arg17[%c0_222, %c0_223, %c0_224] : memref<3x16x144xf32, #tpu.memory_space<vmem>>, vector<3x16x144xf32>
    tpu.vector_store %arg17[%c0_222, %c0_223, %c0_224], %613 {strides = array<i32>} : memref<3x16x144xf32, #tpu.memory_space<vmem>>, vector<3x16x144xf32>,
    return
  }
  func.func @transform_0(%arg0: i32) -> (i32, i32, i32) {
    %c0_i32 = arith.constant 0 : i32
    %c0_i32_0 = arith.constant 0 : i32
    %c0_i32_1 = arith.constant 0 : i32
    return %arg0, %c0_i32, %c0_i32_0 : i32, i32, i32
  }
  func.func @transform_1(%arg0: i32) -> (i32, i32) {
    %c0_i32 = arith.constant 0 : i32
    %c0_i32_0 = arith.constant 0 : i32
    %c0_i32_1 = arith.constant 0 : i32
    return %c0_i32, %c0_i32_0 : i32, i32
  }
  func.func @transform_2(%arg0: i32) -> (i32, i32) {
    %c0_i32 = arith.constant 0 : i32
    %c0_i32_0 = arith.constant 0 : i32
    %c0_i32_1 = arith.constant 0 : i32
    return %c0_i32, %c0_i32_0 : i32, i32
  }
  func.func @transform_3(%arg0: i32) -> (i32, i32) {
    %c0_i32 = arith.constant 0 : i32
    %c0_i32_0 = arith.constant 0 : i32
    %c0_i32_1 = arith.constant 0 : i32
    return %c0_i32, %c0_i32_0 : i32, i32
  }
  func.func @transform_4(%arg0: i32) -> (i32, i32, i32) {
    %c0_i32 = arith.constant 0 : i32
    %c0_i32_0 = arith.constant 0 : i32
    %c0_i32_1 = arith.constant 0 : i32
    %c0_i32_2 = arith.constant 0 : i32
    return %c0_i32, %c0_i32_0, %c0_i32_1 : i32, i32, i32
  }
  func.func @transform_5(%arg0: i32) -> (i32, i32) {
    %c0_i32 = arith.constant 0 : i32
    %c0_i32_0 = arith.constant 0 : i32
    %c0_i32_1 = arith.constant 0 : i32
    return %c0_i32, %c0_i32_0 : i32, i32
  }
  func.func @transform_6(%arg0: i32) -> (i32, i32) {
    %c0_i32 = arith.constant 0 : i32
    %c0_i32_0 = arith.constant 0 : i32
    %c0_i32_1 = arith.constant 0 : i32
    return %c0_i32, %c0_i32_0 : i32, i32
  }
  func.func @transform_7(%arg0: i32) -> (i32, i32) {
    %c0_i32 = arith.constant 0 : i32
    %c0_i32_0 = arith.constant 0 : i32
    %c0_i32_1 = arith.constant 0 : i32
    return %c0_i32, %c0_i32_0 : i32, i32
  }
  func.func @transform_8(%arg0: i32) -> (i32, i32, i32) {
    %c0_i32 = arith.constant 0 : i32
    %c0_i32_0 = arith.constant 0 : i32
    %c0_i32_1 = arith.constant 0 : i32
    %c0_i32_2 = arith.constant 0 : i32
    return %c0_i32, %c0_i32_0, %c0_i32_1 : i32, i32, i32
  }
  func.func @transform_9(%arg0: i32) -> (i32, i32) {
    %c0_i32 = arith.constant 0 : i32
    %c0_i32_0 = arith.constant 0 : i32
    %c0_i32_1 = arith.constant 0 : i32
    return %c0_i32, %c0_i32_0 : i32, i32
  }
  func.func @transform_10(%arg0: i32) -> (i32, i32) {
    %c0_i32 = arith.constant 0 : i32
    %c0_i32_0 = arith.constant 0 : i32
    %c0_i32_1 = arith.constant 0 : i32
    return %c0_i32, %c0_i32_0 : i32, i32
  }
  func.func @transform_11(%arg0: i32) -> (i32, i32) {
    %c0_i32 = arith.constant 0 : i32
    %c0_i32_0 = arith.constant 0 : i32
    %c0_i32_1 = arith.constant 0 : i32
    return %c0_i32, %c0_i32_0 : i32, i32
  }
  func.func @transform_12(%arg0: i32) -> (i32, i32) {
    %c0_i32 = arith.constant 0 : i32
    %c0_i32_0 = arith.constant 0 : i32
    %c0_i32_1 = arith.constant 0 : i32
    return %c0_i32, %c0_i32_0 : i32, i32
  }
  func.func @transform_13(%arg0: i32) -> (i32, i32) {
    %c0_i32 = arith.constant 0 : i32
    %c0_i32_0 = arith.constant 0 : i32
    %c0_i32_1 = arith.constant 0 : i32
    return %c0_i32, %c0_i32_0 : i32, i32
  }
  func.func @transform_14(%arg0: i32) -> (i32, i32) {
    %c0_i32 = arith.constant 0 : i32
    %c0_i32_0 = arith.constant 0 : i32
    %c0_i32_1 = arith.constant 0 : i32
    return %c0_i32, %c0_i32_0 : i32, i32
  }
  func.func @transform_15(%arg0: i32) -> (i32, i32) {
    %c0_i32 = arith.constant 0 : i32
    %c0_i32_0 = arith.constant 0 : i32
    %c0_i32_1 = arith.constant 0 : i32
    return %c0_i32, %c0_i32_0 : i32, i32
  }
  func.func @transform_16(%arg0: i32) -> (i32, i32, i32) {
    %c0_i32 = arith.constant 0 : i32
    %c0_i32_0 = arith.constant 0 : i32
    %c0_i32_1 = arith.constant 0 : i32
    return %arg0, %c0_i32, %c0_i32_0 : i32, i32, i32
  }
}

</mosaic_0001>

<llo_original>
// kernel: tpu_custom_call.1
$region0: #{tpu_custom_call.1}
  #allocation0 [shape = 'u32[]', space=smem, size = 0x4, offset = 0x4, fixed_abs, tag = 'smem constant byte address 0x4 - core index']
  #allocation1 [shape = 'u32[72,128]{1,0:T(1,128)}', space=vmem, size = 0x9000, scoped, tag = 'internal scratch']
  %s0 = inlined_call_operand.hbm [shape: f32[3,16,144], index: 0, kind: input, shape index: {}]
  %s1 = inlined_call_operand.vmem [shape: f32[4,16], index: 1, kind: input, shape index: {}]
  %s2 = inlined_call_operand.vmem [shape: f32[16,4], index: 2, kind: input, shape index: {}]
  %s3 = inlined_call_operand.vmem [shape: f32[1,4], index: 3, kind: input, shape index: {}]
  %s4 = inlined_call_operand.vmem [shape: f32[4,16,4], index: 4, kind: input, shape index: {}]
  %s5 = inlined_call_operand.vmem [shape: f32[4,4], index: 5, kind: input, shape index: {}]
  %s6 = inlined_call_operand.vmem [shape: f32[4,4], index: 6, kind: input, shape index: {}]
  %s7 = inlined_call_operand.vmem [shape: f32[4,4], index: 7, kind: input, shape index: {}]
  %s8 = inlined_call_operand.vmem [shape: f32[4,4,16], index: 8, kind: input, shape index: {}]
  %s9 = inlined_call_operand.vmem [shape: f32[4,16], index: 9, kind: input, shape index: {}]
  %s10 = inlined_call_operand.vmem [shape: f32[4,16], index: 10, kind: input, shape index: {}]
  %s11 = inlined_call_operand.vmem [shape: f32[4,16], index: 11, kind: input, shape index: {}]
  %s12 = inlined_call_operand.vmem [shape: f32[4,2], index: 12, kind: input, shape index: {}]
  %s13 = inlined_call_operand.vmem [shape: f32[1,2], index: 13, kind: input, shape index: {}]
  %s14 = inlined_call_operand.vmem [shape: f32[2,4], index: 14, kind: input, shape index: {}]
  %s15 = inlined_call_operand.vmem [shape: f32[1,4], index: 15, kind: input, shape index: {}]
  %s16 = inlined_call_operand.hbm [shape: f32[3,16,144], index: 16, kind: output, shape index: {}]
  %s17 = sld [smem:[#allocation0]]
  $region78: #{tpu_custom_call.1} parent=0
    _
  %s19 = ssub.s32 1, %s17
  %s20 = scalar_select 0, %s19, %s17
  $region1: #{tpu_custom_call.1} parent=0
    #allocation2 [shape = 'u8[49152]{0}', space=vmem, size = 0xc000, scoped, tag = 'input window, operand 0, single buffered']
    #allocation3 [shape = 's32[1]{0}', space=sflag, size = 0x4, scoped, tag = 'scoped memory for tpu_custom_call.1']
    #allocation4 [shape = 's32[1]{0}', space=sflag, size = 0x4, scoped, tag = 'scoped memory for tpu_custom_call.1']
    #allocation5 [shape = 'u8[49152]{0}', space=vmem, size = 0xc000, scoped, tag = 'output window, operand 0, single buffered']
    %21 = vsyncpa [#allocation3], 0
    %22 = vsyncpa [#allocation4], 0
    // Predicated region
    $region2: #{tpu_custom_call.1} parent=1 // pred_check
      _
    $region3: #{tpu_custom_call.1} parent=1 // pred_check_branch
      %24 = sbr.rel (0) target = $region5
    $region4: #{tpu_custom_call.1} parent=1 // pred_region
      %26 = vsyncadd [#allocation3], 0
      %s27 = sshll.u32 %s0, 4
      %s28 = int_to_ptr.hbm [resolvable:$true] %s27
      %s29 = sshll.u32 [#allocation2], 4
      %s30 = int_to_ptr.vmem [resolvable:$true] %s29
      %35 = dma.hbm_to_vmem [thread:$0]  %s28, 1536, %s30, [#allocation3], 256, 256, 16
    $region5: #{tpu_custom_call.1} parent=1 // pred_fallthru
      _
    // Predicated region
    $region6: #{tpu_custom_call.1} parent=1 // pred_check
      _
    $region7: #{tpu_custom_call.1} parent=1 // pred_check_branch
      %37 = sbr.rel (0) target = $region9
    $region8: #{tpu_custom_call.1} parent=1 // pred_region
      _
    $region9: #{tpu_custom_call.1} parent=1 // pred_fallthru
      _
    // Predicated region
    $region10: #{tpu_custom_call.1} parent=1 // pred_check
      _
    $region11: #{tpu_custom_call.1} parent=1 // pred_check_branch
      %39 = sbr.rel (0) target = $region13
    $region12: #{tpu_custom_call.1} parent=1 // pred_region
      _
    $region13: #{tpu_custom_call.1} parent=1 // pred_fallthru
      _
    // Predicated region
    $region14: #{tpu_custom_call.1} parent=1 // pred_check
      _
    $region15: #{tpu_custom_call.1} parent=1 // pred_check_branch
      %41 = sbr.rel (0) target = $region17
    $region16: #{tpu_custom_call.1} parent=1 // pred_region
      _
    $region17: #{tpu_custom_call.1} parent=1 // pred_fallthru
      _
    // Predicated region
    $region18: #{tpu_custom_call.1} parent=1 // pred_check
      _
    $region19: #{tpu_custom_call.1} parent=1 // pred_check_branch
      %43 = sbr.rel (0) target = $region21
    $region20: #{tpu_custom_call.1} parent=1 // pred_region
      _
    $region21: #{tpu_custom_call.1} parent=1 // pred_fallthru
      _
    // Predicated region
    $region22: #{tpu_custom_call.1} parent=1 // pred_check
      _
    $region23: #{tpu_custom_call.1} parent=1 // pred_check_branch
      %45 = sbr.rel (0) target = $region25
    $region24: #{tpu_custom_call.1} parent=1 // pred_region
      _
    $region25: #{tpu_custom_call.1} parent=1 // pred_fallthru
      _
    // Predicated region
    $region26: #{tpu_custom_call.1} parent=1 // pred_check
      _
    $region27: #{tpu_custom_call.1} parent=1 // pred_check_branch
      %47 = sbr.rel (0) target = $region29
    $region28: #{tpu_custom_call.1} parent=1 // pred_region
      _
    $region29: #{tpu_custom_call.1} parent=1 // pred_fallthru
      _
    // Predicated region
    $region30: #{tpu_custom_call.1} parent=1 // pred_check
      _
    $region31: #{tpu_custom_call.1} parent=1 // pred_check_branch
      %49 = sbr.rel (0) target = $region33
    $region32: #{tpu_custom_call.1} parent=1 // pred_region
      _
    $region33: #{tpu_custom_call.1} parent=1 // pred_fallthru
      _
    // Predicated region
    $region34: #{tpu_custom_call.1} parent=1 // pred_check
      _
    $region35: #{tpu_custom_call.1} parent=1 // pred_check_branch
      %51 = sbr.rel (0) target = $region37
    $region36: #{tpu_custom_call.1} parent=1 // pred_region
      _
    $region37: #{tpu_custom_call.1} parent=1 // pred_fallthru
      _
    // Predicated region
    $region38: #{tpu_custom_call.1} parent=1 // pred_check
      _
    $region39: #{tpu_custom_call.1} parent=1 // pred_check_branch
      %53 = sbr.rel (0) target = $region41
    $region40: #{tpu_custom_call.1} parent=1 // pred_region
      _
    $region41: #{tpu_custom_call.1} parent=1 // pred_fallthru
      _
    // Predicated region
    $region42: #{tpu_custom_call.1} parent=1 // pred_check
      _
    $region43: #{tpu_custom_call.1} parent=1 // pred_check_branch
      %55 = sbr.rel (0) target = $region45
    $region44: #{tpu_custom_call.1} parent=1 // pred_region
      _
    $region45: #{tpu_custom_call.1} parent=1 // pred_fallthru
      _
    // Predicated region
    $region46: #{tpu_custom_call.1} parent=1 // pred_check
      _
    $region47: #{tpu_custom_call.1} parent=1 // pred_check_branch
      %57 = sbr.rel (0) target = $region49
    $region48: #{tpu_custom_call.1} parent=1 // pred_region
      _
    $region49: #{tpu_custom_call.1} parent=1 // pred_fallthru
      _
    // Predicated region
    $region50: #{tpu_custom_call.1} parent=1 // pred_check
      _
    $region51: #{tpu_custom_call.1} parent=1 // pred_check_branch
      %59 = sbr.rel (0) target = $region53
    $region52: #{tpu_custom_call.1} parent=1 // pred_region
      _
    $region53: #{tpu_custom_call.1} parent=1 // pred_fallthru
      _
    // Predicated region
    $region54: #{tpu_custom_call.1} parent=1 // pred_check
      _
    $region55: #{tpu_custom_call.1} parent=1 // pred_check_branch
      %61 = sbr.rel (0) target = $region57
    $region56: #{tpu_custom_call.1} parent=1 // pred_region
      _
    $region57: #{tpu_custom_call.1} parent=1 // pred_fallthru
      _
    // Predicated region
    $region58: #{tpu_custom_call.1} parent=1 // pred_check
      _
    $region59: #{tpu_custom_call.1} parent=1 // pred_check_branch
      %63 = sbr.rel (0) target = $region61
    $region60: #{tpu_custom_call.1} parent=1 // pred_region
      _
    $region61: #{tpu_custom_call.1} parent=1 // pred_fallthru
      _
    // Predicated region
    $region62: #{tpu_custom_call.1} parent=1 // pred_check
      _
    $region63: #{tpu_custom_call.1} parent=1 // pred_check_branch
      %65 = sbr.rel (0) target = $region65
    $region64: #{tpu_custom_call.1} parent=1 // pred_region
      _
    $region65: #{tpu_custom_call.1} parent=1 // pred_fallthru
      _
    // Predicated region
    $region66: #{tpu_custom_call.1} parent=1 // pred_check
      _
    $region67: #{tpu_custom_call.1} parent=1 // pred_check_branch
      %67 = sbr.rel (0) target = $region69
    $region68: #{tpu_custom_call.1} parent=1 // pred_region
      %69 = dma.done [#allocation3], 1536
    $region69: #{tpu_custom_call.1} parent=1 // pred_fallthru
      _
    %v70 = vld [vmem:[#allocation2] sm:$0xff]
    %v71 = vld [vmem:[#allocation2 + $0x8] sm:$0xff]
    %v72 = vld [vmem:[#allocation2 + $0x10] sm:$0xff]
    %v73 = vld [vmem:[#allocation2 + $0x18] sm:$0xff]
    %v74 = vld [vmem:[#allocation2 + $0x20] sm:$0xff]
    %v75 = vld [vmem:[#allocation2 + $0x28] sm:$0xff]
    %v76 = vld [vmem:[#allocation2 + $0x30] sm:$0xff]
    %v77 = vld [vmem:[#allocation2 + $0x38] sm:$0xff]
    %v78 = vld [vmem:[#allocation2 + $0x40] sm:$0xff]
    %v79 = vld [vmem:[#allocation2 + $0x48] sm:$0xff]
    %v80 = vld [vmem:[#allocation2 + $0x50] sm:$0xff]
    %v81 = vld [vmem:[#allocation2 + $0x58] sm:$0xff]
    %vm82 = vcmask 130048
    %v83 = vsel %vm82, %v71, 0.0
    %v84 = vadd.f32 %v70, %v83
    %85 = vadd.xlane.f32.xlu0 %v84
    %v86 = vpop.xlane.xlu0 %85
    %v87 = vsel %vm82, %v73, 0.0
    %v88 = vadd.f32 %v72, %v87
    %89 = vadd.xlane.f32.xlu0 %v88
    %v90 = vpop.xlane.xlu0 %89
    %v91 = vsel %vm82, %v75, 0.0
    %v92 = vadd.f32 %v74, %v91
    %93 = vadd.xlane.f32.xlu0 %v92
    %v94 = vpop.xlane.xlu0 %93
    %v95 = vsel %vm82, %v77, 0.0
    %v96 = vadd.f32 %v76, %v95
    %97 = vadd.xlane.f32.xlu0 %v96
    %v98 = vpop.xlane.xlu0 %97
    %v99 = vsel %vm82, %v79, 0.0
    %v100 = vadd.f32 %v78, %v99
    %101 = vadd.xlane.f32.xlu0 %v100
    %v102 = vpop.xlane.xlu0 %101
    %v103 = vsel %vm82, %v81, 0.0
    %v104 = vadd.f32 %v80, %v103
    %105 = vadd.xlane.f32.xlu0 %v104
    %v106 = vpop.xlane.xlu0 %105
    %v107 = vmul.f32 %v86, 0.0069444445
    %v108 = vmul.f32 %v90, 0.0069444445
    %v109 = vmul.f32 %v94, 0.0069444445
    %v110 = vmul.f32 %v98, 0.0069444445
    %v111 = vmul.f32 %v102, 0.0069444445
    %v112 = vmul.f32 %v106, 0.0069444445
    %v113 = vsel %vm82, %v71, -inf
    %v114 = vmax.f32 %v70, %v113
    %115 = vmax.xlane.f32.xlu0 %v114
    %v116 = vpop.xlane.xlu0 %115
    %v117 = vsel %vm82, %v73, -inf
    %v118 = vmax.f32 %v72, %v117
    %119 = vmax.xlane.f32.xlu0 %v118
    %v120 = vpop.xlane.xlu0 %119
    %v121 = vsel %vm82, %v75, -inf
    %v122 = vmax.f32 %v74, %v121
    %123 = vmax.xlane.f32.xlu0 %v122
    %v124 = vpop.xlane.xlu0 %123
    %v125 = vsel %vm82, %v77, -inf
    %v126 = vmax.f32 %v76, %v125
    %127 = vmax.xlane.f32.xlu0 %v126
    %v128 = vpop.xlane.xlu0 %127
    %v129 = vsel %vm82, %v79, -inf
    %v130 = vmax.f32 %v78, %v129
    %131 = vmax.xlane.f32.xlu0 %v130
    %v132 = vpop.xlane.xlu0 %131
    %v133 = vsel %vm82, %v81, -inf
    %v134 = vmax.f32 %v80, %v133
    %135 = vmax.xlane.f32.xlu0 %v134
    %v136 = vpop.xlane.xlu0 %135
    %v137 = vld [vmem:[%s3] sm:$0x1]
    %v138 = vld [vmem:[%s2] sm:$0xff]
    %v139 = vld [vmem:[%s2 + $0x8] sm:$0xff]
    %v141 = vperm.slane %v137, 0
    %v149 = vlaneseq
    %v150 = vand.u32 %v149, 127
    %v151 = vperm.slane %v107, %v150
    %v152 = vadd.s32 %v150, 4294967288
    %v153 = vperm.slane %v108, %v152
    %vm154 = vcmask 130112
    %v155 = vsel %vm154, %v153, %v151
    %v156 = vperm.slane %v109, %v150
    %v157 = vperm.slane %v110, %v152
    %v158 = vsel %vm154, %v157, %v156
    %v159 = vperm.slane %v111, %v150
    %v160 = vperm.slane %v112, %v152
    %v161 = vsel %vm154, %v160, %v159
    %vm162 = vcmask 1041409
    %v163 = vsel %vm162, %v158, %v155
    %vm164 = vcmask 1042434
    %v165 = vsel %vm164, %v161, %v163
    %v166 = vsel %vm82, %v165, 0
    %168 = vmatpush.msra.mxu0 0.0
    %169 = vmatpush.msra.mxu0 0.0
    %170 = vmatpush.msra.mxu0 0.0
    %171 = vmatpush.msra.mxu0 0.0
    %172 = vmatpush.msra.mxu0 0.0
    %173 = vmatpush.msra.mxu0 0.0
    %174 = vmatpush.msra.mxu0 0.0
    %175 = vmatpush.msra.mxu0 0.0
    %176 = vmatpush.msra.mxu0 0.0
    %177 = vmatpush.msra.mxu0 0.0
    %178 = vmatpush.msra.mxu0 0.0
    %179 = vmatpush.msra.mxu0 0.0
    %180 = vmatpush.msra.mxu0 0.0
    %181 = vmatpush.msra.mxu0 0.0
    %182 = vmatpush.msra.mxu0 %v139
    %183 = vmatpush.msra.mxu0 %v138
    %184 = vmatmul.f32.gmra.mxu0 %v166
    %v185 = vpop.f32.mrf.mxu0
    %v186 = vadd.f32 %v141, %v185
    %187 = vdwg.mxu0
    %v188 = vld [vmem:[%s1] sm:$0xf]
    %v189 = vld [vmem:[#allocation2] sm:$0xff]
    %v190 = vld [vmem:[#allocation2 + $0x8] sm:$0xff]
    %v191 = vld [vmem:[#allocation2 + $0x10] sm:$0xff]
    %v192 = vld [vmem:[#allocation2 + $0x18] sm:$0xff]
    %v194 = vsel %vm82, %v188, 0
    %196 = vmatpush.msra.mxu0 0.0
    %197 = vmatpush.msra.mxu0 0.0
    %198 = vmatpush.msra.mxu0 0.0
    %199 = vmatpush.msra.mxu0 0.0
    %200 = vmatpush.msra.mxu0 0.0
    %201 = vmatpush.msra.mxu0 0.0
    %202 = vmatpush.msra.mxu0 0.0
    %203 = vmatpush.msra.mxu0 0.0
    %204 = vmatpush.msra.mxu0 0.0
    %205 = vmatpush.msra.mxu0 0.0
    %206 = vmatpush.msra.mxu0 0.0
    %207 = vmatpush.msra.mxu0 0.0
    %208 = vmatpush.msra.mxu0 0.0
    %209 = vmatpush.msra.mxu0 0.0
    %210 = vmatpush.msra.mxu0 %v191
    %211 = vmatpush.msra.mxu0 %v189
    %212 = vmatmul.f32.gmra.mxu0 %v194
    %v213 = vpop.f32.mrf.mxu0
    %v214 = vadd.f32 0.0, %v213
    %215 = vdwg.mxu0
    %216 = vmatpush.msra.mxu0 0.0
    %217 = vmatpush.msra.mxu0 0.0
    %218 = vmatpush.msra.mxu0 0.0
    %219 = vmatpush.msra.mxu0 0.0
    %220 = vmatpush.msra.mxu0 0.0
    %221 = vmatpush.msra.mxu0 0.0
    %222 = vmatpush.msra.mxu0 0.0
    %223 = vmatpush.msra.mxu0 0.0
    %224 = vmatpush.msra.mxu0 0.0
    %225 = vmatpush.msra.mxu0 0.0
    %226 = vmatpush.msra.mxu0 0.0
    %227 = vmatpush.msra.mxu0 0.0
    %228 = vmatpush.msra.mxu0 0.0
    %229 = vmatpush.msra.mxu0 0.0
    %230 = vmatpush.msra.mxu0 %v192
    %231 = vmatpush.msra.mxu0 %v190
    %232 = vmatmul.f32.gmra.mxu0 %v194
    %v233 = vpop.f32.mrf.mxu0
    %v234 = vadd.f32 0.0, %v233
    %235 = vdwg.mxu0
    %vm236 = vcmask 1043456
    %v237 = vsel %vm236, %v214, -inf
    %vm238 = vcmask 125952
    %v239 = vsel %vm238, %v234, -inf
    %v240 = vmax.f32 %v237, %v239
    %241 = vmax.xlane.f32.xlu0 %v240
    %v242 = vpop.xlane.xlu0 %241
    %243 = vxpose.xlu0.b32.start [1/16] %v242, 128
    %244 = vxpose.xlu0.b32.cont [2/16] 0.0, 128
    %245 = vxpose.xlu0.b32.cont [3/16] 0.0, 128
    %246 = vxpose.xlu0.b32.cont [4/16] 0.0, 128
    %247 = vxpose.xlu0.b32.cont [5/16] 0.0, 128
    %248 = vxpose.xlu0.b32.cont [6/16] 0.0, 128
    %249 = vxpose.xlu0.b32.cont [7/16] 0.0, 128
    %250 = vxpose.xlu0.b32.cont [8/16] 0.0, 128
    %251 = vxpose.xlu0.b32.cont [9/16] 0.0, 128
    %252 = vxpose.xlu0.b32.cont [10/16] 0.0, 128
    %253 = vxpose.xlu0.b32.cont [11/16] 0.0, 128
    %254 = vxpose.xlu0.b32.cont [12/16] 0.0, 128
    %255 = vxpose.xlu0.b32.cont [13/16] 0.0, 128
    %256 = vxpose.xlu0.b32.cont [14/16] 0.0, 128
    %257 = vxpose.xlu0.b32.cont [15/16] 0.0, 128
    %258 = vxpose.xlu0.b32.end [16/16] 0.0, 128
    %v259 = vpop.trf.xlu0
    %v260 = vpop.trf.xlu0
    %v261 = vpop.trf.xlu0
    %v262 = vpop.trf.xlu0
    %v263 = vpop.trf.xlu0
    %v264 = vpop.trf.xlu0
    %v265 = vpop.trf.xlu0
    %v266 = vpop.trf.xlu0
    %v267 = vpop.trf.xlu0
    %v268 = vpop.trf.xlu0
    %v269 = vpop.trf.xlu0
    %v270 = vpop.trf.xlu0
    %v271 = vpop.trf.xlu0
    %v272 = vpop.trf.xlu0
    %v273 = vpop.trf.xlu0
    %v274 = vpop.trf.xlu0
    %s275 = scalar_lea.vmem [#allocation2], 32
    %v276 = vld [vmem:[%s275] sm:$0xff]
    %v277 = vld [vmem:[%s275 + $0x8] sm:$0xff]
    %v278 = vld [vmem:[%s275 + $0x10] sm:$0xff]
    %v279 = vld [vmem:[%s275 + $0x18] sm:$0xff]
    %280 = vmatpush.msra.mxu0 0.0
    %281 = vmatpush.msra.mxu0 0.0
    %282 = vmatpush.msra.mxu0 0.0
    %283 = vmatpush.msra.mxu0 0.0
    %284 = vmatpush.msra.mxu0 0.0
    %285 = vmatpush.msra.mxu0 0.0
    %286 = vmatpush.msra.mxu0 0.0
    %287 = vmatpush.msra.mxu0 0.0
    %288 = vmatpush.msra.mxu0 0.0
    %289 = vmatpush.msra.mxu0 0.0
    %290 = vmatpush.msra.mxu0 0.0
    %291 = vmatpush.msra.mxu0 0.0
    %292 = vmatpush.msra.mxu0 0.0
    %293 = vmatpush.msra.mxu0 0.0
    %294 = vmatpush.msra.mxu0 %v278
    %295 = vmatpush.msra.mxu0 %v276
    %296 = vmatmul.f32.gmra.mxu0 %v194
    %v297 = vpop.f32.mrf.mxu0
    %v298 = vadd.f32 0.0, %v297
    %299 = vdwg.mxu0
    %300 = vmatpush.msra.mxu0 0.0
    %301 = vmatpush.msra.mxu0 0.0
    %302 = vmatpush.msra.mxu0 0.0
    %303 = vmatpush.msra.mxu0 0.0
    %304 = vmatpush.msra.mxu0 0.0
    %305 = vmatpush.msra.mxu0 0.0
    %306 = vmatpush.msra.mxu0 0.0
    %307 = vmatpush.msra.mxu0 0.0
    %308 = vmatpush.msra.mxu0 0.0
    %309 = vmatpush.msra.mxu0 0.0
    %310 = vmatpush.msra.mxu0 0.0
    %311 = vmatpush.msra.mxu0 0.0
    %312 = vmatpush.msra.mxu0 0.0
    %313 = vmatpush.msra.mxu0 0.0
    %314 = vmatpush.msra.mxu0 %v279
    %315 = vmatpush.msra.mxu0 %v277
    %316 = vmatmul.f32.gmra.mxu0 %v194
    %v317 = vpop.f32.mrf.mxu0
    %v318 = vadd.f32 0.0, %v317
    %319 = vdwg.mxu0
    %v320 = vsel %vm236, %v298, -inf
    %v321 = vsel %vm238, %v318, -inf
    %v322 = vmax.f32 %v320, %v321
    %323 = vmax.xlane.f32.xlu0 %v322
    %v324 = vpop.xlane.xlu0 %323
    %325 = vxpose.xlu0.b32.start [1/16] %v324, 128
    %326 = vxpose.xlu0.b32.cont [2/16] 0.0, 128
    %327 = vxpose.xlu0.b32.cont [3/16] 0.0, 128
    %328 = vxpose.xlu0.b32.cont [4/16] 0.0, 128
    %329 = vxpose.xlu0.b32.cont [5/16] 0.0, 128
    %330 = vxpose.xlu0.b32.cont [6/16] 0.0, 128
    %331 = vxpose.xlu0.b32.cont [7/16] 0.0, 128
    %332 = vxpose.xlu0.b32.cont [8/16] 0.0, 128
    %333 = vxpose.xlu0.b32.cont [9/16] 0.0, 128
    %334 = vxpose.xlu0.b32.cont [10/16] 0.0, 128
    %335 = vxpose.xlu0.b32.cont [11/16] 0.0, 128
    %336 = vxpose.xlu0.b32.cont [12/16] 0.0, 128
    %337 = vxpose.xlu0.b32.cont [13/16] 0.0, 128
    %338 = vxpose.xlu0.b32.cont [14/16] 0.0, 128
    %339 = vxpose.xlu0.b32.cont [15/16] 0.0, 128
    %340 = vxpose.xlu0.b32.end [16/16] 0.0, 128
    %v341 = vpop.trf.xlu0
    %v342 = vpop.trf.xlu0
    %v343 = vpop.trf.xlu0
    %v344 = vpop.trf.xlu0
    %v345 = vpop.trf.xlu0
    %v346 = vpop.trf.xlu0
    %v347 = vpop.trf.xlu0
    %v348 = vpop.trf.xlu0
    %v349 = vpop.trf.xlu0
    %v350 = vpop.trf.xlu0
    %v351 = vpop.trf.xlu0
    %v352 = vpop.trf.xlu0
    %v353 = vpop.trf.xlu0
    %v354 = vpop.trf.xlu0
    %v355 = vpop.trf.xlu0
    %v356 = vpop.trf.xlu0
    %s357 = scalar_lea.vmem [#allocation2], 64
    %v358 = vld [vmem:[%s357] sm:$0xff]
    %v359 = vld [vmem:[%s357 + $0x8] sm:$0xff]
    %v360 = vld [vmem:[%s357 + $0x10] sm:$0xff]
    %v361 = vld [vmem:[%s357 + $0x18] sm:$0xff]
    %362 = vmatpush.msra.mxu0 0.0
    %363 = vmatpush.msra.mxu0 0.0
    %364 = vmatpush.msra.mxu0 0.0
    %365 = vmatpush.msra.mxu0 0.0
    %366 = vmatpush.msra.mxu0 0.0
    %367 = vmatpush.msra.mxu0 0.0
    %368 = vmatpush.msra.mxu0 0.0
    %369 = vmatpush.msra.mxu0 0.0
    %370 = vmatpush.msra.mxu0 0.0
    %371 = vmatpush.msra.mxu0 0.0
    %372 = vmatpush.msra.mxu0 0.0
    %373 = vmatpush.msra.mxu0 0.0
    %374 = vmatpush.msra.mxu0 0.0
    %375 = vmatpush.msra.mxu0 0.0
    %376 = vmatpush.msra.mxu0 %v360
    %377 = vmatpush.msra.mxu0 %v358
    %378 = vmatmul.f32.gmra.mxu0 %v194
    %v379 = vpop.f32.mrf.mxu0
    %v380 = vadd.f32 0.0, %v379
    %381 = vdwg.mxu0
    %382 = vmatpush.msra.mxu0 0.0
    %383 = vmatpush.msra.mxu0 0.0
    %384 = vmatpush.msra.mxu0 0.0
    %385 = vmatpush.msra.mxu0 0.0
    %386 = vmatpush.msra.mxu0 0.0
    %387 = vmatpush.msra.mxu0 0.0
    %388 = vmatpush.msra.mxu0 0.0
    %389 = vmatpush.msra.mxu0 0.0
    %390 = vmatpush.msra.mxu0 0.0
    %391 = vmatpush.msra.mxu0 0.0
    %392 = vmatpush.msra.mxu0 0.0
    %393 = vmatpush.msra.mxu0 0.0
    %394 = vmatpush.msra.mxu0 0.0
    %395 = vmatpush.msra.mxu0 0.0
    %396 = vmatpush.msra.mxu0 %v361
    %397 = vmatpush.msra.mxu0 %v359
    %398 = vmatmul.f32.gmra.mxu0 %v194
    %v399 = vpop.f32.mrf.mxu0
    %v400 = vadd.f32 0.0, %v399
    %401 = vdwg.mxu0
    %v402 = vsel %vm236, %v380, -inf
    %v403 = vsel %vm238, %v400, -inf
    %v404 = vmax.f32 %v402, %v403
    %405 = vmax.xlane.f32.xlu0 %v404
    %v406 = vpop.xlane.xlu0 %405
    %407 = vxpose.xlu0.b32.start [1/16] %v406, 128
    %408 = vxpose.xlu0.b32.cont [2/16] 0.0, 128
    %409 = vxpose.xlu0.b32.cont [3/16] 0.0, 128
    %410 = vxpose.xlu0.b32.cont [4/16] 0.0, 128
    %411 = vxpose.xlu0.b32.cont [5/16] 0.0, 128
    %412 = vxpose.xlu0.b32.cont [6/16] 0.0, 128
    %413 = vxpose.xlu0.b32.cont [7/16] 0.0, 128
    %414 = vxpose.xlu0.b32.cont [8/16] 0.0, 128
    %415 = vxpose.xlu0.b32.cont [9/16] 0.0, 128
    %416 = vxpose.xlu0.b32.cont [10/16] 0.0, 128
    %417 = vxpose.xlu0.b32.cont [11/16] 0.0, 128
    %418 = vxpose.xlu0.b32.cont [12/16] 0.0, 128
    %419 = vxpose.xlu0.b32.cont [13/16] 0.0, 128
    %420 = vxpose.xlu0.b32.cont [14/16] 0.0, 128
    %421 = vxpose.xlu0.b32.cont [15/16] 0.0, 128
    %422 = vxpose.xlu0.b32.end [16/16] 0.0, 128
    %v423 = vpop.trf.xlu0
    %v424 = vpop.trf.xlu0
    %v425 = vpop.trf.xlu0
    %v426 = vpop.trf.xlu0
    %v427 = vpop.trf.xlu0
    %v428 = vpop.trf.xlu0
    %v429 = vpop.trf.xlu0
    %v430 = vpop.trf.xlu0
    %v431 = vpop.trf.xlu0
    %v432 = vpop.trf.xlu0
    %v433 = vpop.trf.xlu0
    %v434 = vpop.trf.xlu0
    %v435 = vpop.trf.xlu0
    %v436 = vpop.trf.xlu0
    %v437 = vpop.trf.xlu0
    %v438 = vpop.trf.xlu0
    %v440 = vrot.slane %v341, 7
    %v443 = vrot.slane %v423, 6
    %vm445 = vcmask 1040384
    %v446 = vsel %vm445, %v259, %v440
    %vm447 = vcmask 1041408
    %v448 = vsel %vm447, %v446, %v443
    %v449 = vadd.f32 %v448, %v141
    %v450 = vld [vmem:[%s12] sm:$0xf]
    %v451 = vld [vmem:[%s13] sm:$0x1]
    %v452 = vld [vmem:[%s14] sm:$0x3]
    %v453 = vld [vmem:[%s15] sm:$0x1]
    %v455 = vperm.slane %v451, 0
    %vm457 = vcmask 31744
    %v459 = vsel %vm457, %v186, 0
    %v462 = vsel %vm236, %v450, 0
    %464 = vmatpush.msra.mxu0 0.0
    %465 = vmatpush.msra.mxu0 0.0
    %466 = vmatpush.msra.mxu0 0.0
    %467 = vmatpush.msra.mxu0 0.0
    %468 = vmatpush.msra.mxu0 0.0
    %469 = vmatpush.msra.mxu0 0.0
    %470 = vmatpush.msra.mxu0 0.0
    %471 = vmatpush.msra.mxu0 0.0
    %472 = vmatpush.msra.mxu0 0.0
    %473 = vmatpush.msra.mxu0 0.0
    %474 = vmatpush.msra.mxu0 0.0
    %475 = vmatpush.msra.mxu0 0.0
    %476 = vmatpush.msra.mxu0 0.0
    %477 = vmatpush.msra.mxu0 0.0
    %478 = vmatpush.msra.mxu0 0.0
    %479 = vmatpush.msra.mxu0 %v462
    %480 = vmatmul.f32.gmra.mxu0 %v459
    %v481 = vpop.f32.mrf.mxu0
    %v482 = vadd.f32 %v455, %v481
    %483 = vdwg.mxu0
    %v484 = vmax.f32 %v482, 0.0
    %v486 = vperm.slane %v453, 0
    %vm488 = vcmask 15360
    %v490 = vsel %vm488, %v484, 0
    %v493 = vsel %vm447, %v452, 0
    %495 = vmatpush.msra.mxu0 0.0
    %496 = vmatpush.msra.mxu0 0.0
    %497 = vmatpush.msra.mxu0 0.0
    %498 = vmatpush.msra.mxu0 0.0
    %499 = vmatpush.msra.mxu0 0.0
    %500 = vmatpush.msra.mxu0 0.0
    %501 = vmatpush.msra.mxu0 0.0
    %502 = vmatpush.msra.mxu0 0.0
    %503 = vmatpush.msra.mxu0 0.0
    %504 = vmatpush.msra.mxu0 0.0
    %505 = vmatpush.msra.mxu0 0.0
    %506 = vmatpush.msra.mxu0 0.0
    %507 = vmatpush.msra.mxu0 0.0
    %508 = vmatpush.msra.mxu0 0.0
    %509 = vmatpush.msra.mxu0 0.0
    %510 = vmatpush.msra.mxu0 %v493
    %511 = vmatmul.f32.gmra.mxu0 %v490
    %v512 = vpop.f32.mrf.mxu0
    %v513 = vadd.f32 %v486, %v512
    %514 = vdwg.mxu0
    %vm515 = vcmask 26624
    %v516 = vsel %vm515, %v513, -inf
    %517 = vmax.xlane.f32.xlu0 %v516
    %v518 = vpop.xlane.xlu0 %517
    %v519 = vsub.f32 %v513, %v518
    %v520 = vmul.f32 %v519, 1.442695
    %v521 = vpow.pop %v520
    %v522 = vsel %vm515, %v521, 0.0
    %523 = vadd.xlane.f32.xlu0 %v522
    %v524 = vpop.xlane.xlu0 %523
    %v525 = vrcp.pop %v524
    %v526 = vmul.f32 %v524, %v525
    %v527 = vsub.f32 1.0, %v526
    %v528 = vmul.f32 %v525, %v527
    %v529 = vadd.f32 %v525, %v528
    %vm530 = vweird.f32 %v524
    %vm531 = vweird.f32 %v525
    %vm532 = vmor %vm530, %vm531
    %v533 = vsel %vm532, %v525, %v529
    %v534 = vand.u32 2147483647, %v524
    %vm535 = vcmp.eq.f32.partialorder %v534, 8.507059e+37
    %v536 = vand.u32 %v524, 2147483648
    %v537 = vor.u32 1.1754944e-38, %v536
    %v538 = vsel %vm535, %v537, %v533
    %v539 = vmul.f32 %v521, %v538
    %v541 = vsel %vm457, %v449, 0
    %543 = vmatpush.msra.mxu0 0.0
    %544 = vmatpush.msra.mxu0 0.0
    %545 = vmatpush.msra.mxu0 0.0
    %546 = vmatpush.msra.mxu0 0.0
    %547 = vmatpush.msra.mxu0 0.0
    %548 = vmatpush.msra.mxu0 0.0
    %549 = vmatpush.msra.mxu0 0.0
    %550 = vmatpush.msra.mxu0 0.0
    %551 = vmatpush.msra.mxu0 0.0
    %552 = vmatpush.msra.mxu0 0.0
    %553 = vmatpush.msra.mxu0 0.0
    %554 = vmatpush.msra.mxu0 0.0
    %555 = vmatpush.msra.mxu0 0.0
    %556 = vmatpush.msra.mxu0 0.0
    %557 = vmatpush.msra.mxu0 0.0
    %558 = vmatpush.msra.mxu0 %v462
    %559 = vmatmul.f32.gmra.mxu0 %v541
    %v560 = vpop.f32.mrf.mxu0
    %v561 = vadd.f32 %v455, %v560
    %562 = vdwg.mxu0
    %v563 = vmax.f32 %v561, 0.0
    %v565 = vsel %vm488, %v563, 0
    %567 = vmatpush.msra.mxu0 0.0
    %568 = vmatpush.msra.mxu0 0.0
    %569 = vmatpush.msra.mxu0 0.0
    %570 = vmatpush.msra.mxu0 0.0
    %571 = vmatpush.msra.mxu0 0.0
    %572 = vmatpush.msra.mxu0 0.0
    %573 = vmatpush.msra.mxu0 0.0
    %574 = vmatpush.msra.mxu0 0.0
    %575 = vmatpush.msra.mxu0 0.0
    %576 = vmatpush.msra.mxu0 0.0
    %577 = vmatpush.msra.mxu0 0.0
    %578 = vmatpush.msra.mxu0 0.0
    %579 = vmatpush.msra.mxu0 0.0
    %580 = vmatpush.msra.mxu0 0.0
    %581 = vmatpush.msra.mxu0 0.0
    %582 = vmatpush.msra.mxu0 %v493
    %583 = vmatmul.f32.gmra.mxu0 %v565
    %v584 = vpop.f32.mrf.mxu0
    %v585 = vadd.f32 %v486, %v584
    %586 = vdwg.mxu0
    %v587 = vsel %vm515, %v585, -inf
    %588 = vmax.xlane.f32.xlu0 %v587
    %v589 = vpop.xlane.xlu0 %588
    %v590 = vsub.f32 %v585, %v589
    %v591 = vmul.f32 %v590, 1.442695
    %v592 = vpow.pop %v591
    %v593 = vsel %vm515, %v592, 0.0
    %594 = vadd.xlane.f32.xlu0 %v593
    %v595 = vpop.xlane.xlu0 %594
    %v596 = vrcp.pop %v595
    %v597 = vmul.f32 %v595, %v596
    %v598 = vsub.f32 1.0, %v597
    %v599 = vmul.f32 %v596, %v598
    %v600 = vadd.f32 %v596, %v599
    %vm601 = vweird.f32 %v595
    %vm602 = vweird.f32 %v596
    %vm603 = vmor %vm601, %vm602
    %v604 = vsel %vm603, %v596, %v600
    %v605 = vand.u32 2147483647, %v595
    %vm606 = vcmp.eq.f32.partialorder %v605, 8.507059e+37
    %v607 = vand.u32 %v595, 2147483648
    %v608 = vor.u32 1.1754944e-38, %v607
    %v609 = vsel %vm606, %v608, %v604
    %v610 = vmul.f32 %v592, %v609
    %v611 = vadd.f32 %v539, %v610
    %v612 = vld [vmem:[%s5] sm:$0xf]
    %v613 = vld [vmem:[%s6] sm:$0xf]
    %v614 = vld [vmem:[%s7] sm:$0xf]
    %v615 = vld [vmem:[%s9] sm:$0xf]
    %v616 = vld [vmem:[%s10] sm:$0xf]
    %v617 = vld [vmem:[%s11] sm:$0xf]
    %v618 = vld [vmem:[%s4] sm:$0xff]
    %v619 = vld [vmem:[%s4 + $0x8] sm:$0xff]
    %v620 = vperm.slane %v612, 0
    %621 = vmatpush.msra.mxu0 0.0
    %622 = vmatpush.msra.mxu0 0.0
    %623 = vmatpush.msra.mxu0 0.0
    %624 = vmatpush.msra.mxu0 0.0
    %625 = vmatpush.msra.mxu0 0.0
    %626 = vmatpush.msra.mxu0 0.0
    %627 = vmatpush.msra.mxu0 0.0
    %628 = vmatpush.msra.mxu0 0.0
    %629 = vmatpush.msra.mxu0 0.0
    %630 = vmatpush.msra.mxu0 0.0
    %631 = vmatpush.msra.mxu0 0.0
    %632 = vmatpush.msra.mxu0 0.0
    %633 = vmatpush.msra.mxu0 0.0
    %634 = vmatpush.msra.mxu0 0.0
    %635 = vmatpush.msra.mxu0 %v619
    %636 = vmatpush.msra.mxu0 %v618
    %637 = vmatmul.f32.gmra.mxu0 %v166
    %v638 = vpop.f32.mrf.mxu0
    %v639 = vadd.f32 %v620, %v638
    %640 = vdwg.mxu0
    %v641 = vsel %vm515, %v639, 0.0
    %642 = vadd.xlane.f32.xlu0 %v641
    %v643 = vpop.xlane.xlu0 %642
    %v644 = vrcp.pop 4.0
    %v645 = vmul.f32 4.0, %v644
    %v646 = vsub.f32 1.0, %v645
    %v647 = vmul.f32 %v644, %v646
    %v648 = vadd.f32 %v644, %v647
    %vm649 = vweird.f32 %v644
    %v650 = vsel %vm649, %v644, %v648
    %v651 = vmul.f32 %v643, %v650
    %v652 = vsub.f32 %v639, %v651
    %v653 = vmul.f32 %v652, %v652
    %v654 = vsel %vm515, %v653, 0.0
    %655 = vadd.xlane.f32.xlu0 %v654
    %v656 = vpop.xlane.xlu0 %655
    %v657 = vmul.f32 %v656, %v650
    %v658 = vadd.f32 %v657, 1e-05
    %v659 = vrsqrt.pop %v658
    %v660 = vmul.f32 %v659, %v658
    %v661 = vmul.f32 %v660, %v659
    %v662 = vmul.f32 0.5, %v661
    %v663 = vsub.f32 1.5, %v662
    %v664 = vmul.f32 %v659, %v663
    %vm665 = vweird.f32 %v658
    %vm666 = vweird.f32 %v659
    %vm667 = vmor %vm665, %vm666
    %v668 = vsel %vm667, %v659, %v664
    %v669 = vmul.f32 %v652, %v668
    %v670 = vperm.slane %v613, 0
    %v671 = vmul.f32 %v669, %v670
    %v672 = vperm.slane %v614, 0
    %v673 = vadd.f32 %v671, %v672
    %v674 = vmax.f32 %v673, 0.0
    %v675 = vld [vmem:[%s8] sm:$0xf]
    %v676 = vperm.slane %v615, 0
    %v678 = vsel %vm457, %v674, 0
    %v681 = vsel %vm236, %v675, 0
    %683 = vmatpush.msra.mxu0 0.0
    %684 = vmatpush.msra.mxu0 0.0
    %685 = vmatpush.msra.mxu0 0.0
    %686 = vmatpush.msra.mxu0 0.0
    %687 = vmatpush.msra.mxu0 0.0
    %688 = vmatpush.msra.mxu0 0.0
    %689 = vmatpush.msra.mxu0 0.0
    %690 = vmatpush.msra.mxu0 0.0
    %691 = vmatpush.msra.mxu0 0.0
    %692 = vmatpush.msra.mxu0 0.0
    %693 = vmatpush.msra.mxu0 0.0
    %694 = vmatpush.msra.mxu0 0.0
    %695 = vmatpush.msra.mxu0 0.0
    %696 = vmatpush.msra.mxu0 0.0
    %697 = vmatpush.msra.mxu0 0.0
    %698 = vmatpush.msra.mxu0 %v681
    %699 = vmatmul.f32.gmra.mxu0 %v678
    %v700 = vpop.f32.mrf.mxu0
    %v701 = vadd.f32 %v676, %v700
    %702 = vdwg.mxu0
    %vm703 = vcmask 124928
    %v704 = vsel %vm703, %v701, 0.0
    %705 = vadd.xlane.f32.xlu0 %v704
    %v706 = vpop.xlane.xlu0 %705
    %v707 = vrcp.pop 16.0
    %v708 = vmul.f32 16.0, %v707
    %v709 = vsub.f32 1.0, %v708
    %v710 = vmul.f32 %v707, %v709
    %v711 = vadd.f32 %v707, %v710
    %vm712 = vweird.f32 %v707
    %v713 = vsel %vm712, %v707, %v711
    %v714 = vmul.f32 %v706, %v713
    %v715 = vsub.f32 %v701, %v714
    %v716 = vmul.f32 %v715, %v715
    %v717 = vsel %vm703, %v716, 0.0
    %718 = vadd.xlane.f32.xlu0 %v717
    %v719 = vpop.xlane.xlu0 %718
    %v720 = vmul.f32 %v719, %v713
    %v721 = vadd.f32 %v720, 1e-05
    %v722 = vrsqrt.pop %v721
    %v723 = vmul.f32 %v722, %v721
    %v724 = vmul.f32 %v723, %v722
    %v725 = vmul.f32 0.5, %v724
    %v726 = vsub.f32 1.5, %v725
    %v727 = vmul.f32 %v722, %v726
    %vm728 = vweird.f32 %v721
    %vm729 = vweird.f32 %v722
    %vm730 = vmor %vm728, %vm729
    %v731 = vsel %vm730, %v722, %v727
    %v732 = vmul.f32 %v715, %v731
    %v733 = vperm.slane %v616, 0
    %v734 = vmul.f32 %v732, %v733
    %v735 = vperm.slane %v617, 0
    %v736 = vadd.f32 %v734, %v735
    %v737 = vxor.u32 %v736, 2147483648
    %v738 = vmul.f32 %v737, 1.442695
    %v739 = vpow.pop %v738
    %v740 = vadd.f32 %v739, 1.0
    %v741 = vrcp.pop %v740
    %v742 = vmul.f32 %v740, %v741
    %v743 = vsub.f32 1.0, %v742
    %v744 = vmul.f32 %v741, %v743
    %v745 = vadd.f32 %v741, %v744
    %vm746 = vweird.f32 %v740
    %vm747 = vweird.f32 %v741
    %vm748 = vmor %vm746, %vm747
    %v749 = vsel %vm748, %v741, %v745
    %v750 = vand.u32 2147483647, %v740
    %vm751 = vcmp.eq.f32.partialorder %v750, 8.507059e+37
    %v752 = vand.u32 %v740, 2147483648
    %v753 = vor.u32 1.1754944e-38, %v752
    %v754 = vsel %vm751, %v753, %v749
    %v755 = vmul.f32 1.0, %v754
    %v762 = vperm.slane %v116, %v150
    %v763 = vperm.slane %v120, %v152
    %v764 = vsel %vm154, %v763, %v762
    %v765 = vperm.slane %v124, %v150
    %v766 = vperm.slane %v128, %v152
    %v767 = vsel %vm154, %v766, %v765
    %v768 = vperm.slane %v132, %v150
    %v769 = vperm.slane %v136, %v152
    %v770 = vsel %vm154, %v769, %v768
    %v771 = vsel %vm162, %v767, %v764
    %v772 = vsel %vm164, %v770, %v771
    %v773 = vsel %vm82, %v772, 0
    %775 = vmatpush.msra.mxu0 0.0
    %776 = vmatpush.msra.mxu0 0.0
    %777 = vmatpush.msra.mxu0 0.0
    %778 = vmatpush.msra.mxu0 0.0
    %779 = vmatpush.msra.mxu0 0.0
    %780 = vmatpush.msra.mxu0 0.0
    %781 = vmatpush.msra.mxu0 0.0
    %782 = vmatpush.msra.mxu0 0.0
    %783 = vmatpush.msra.mxu0 0.0
    %784 = vmatpush.msra.mxu0 0.0
    %785 = vmatpush.msra.mxu0 0.0
    %786 = vmatpush.msra.mxu0 0.0
    %787 = vmatpush.msra.mxu0 0.0
    %788 = vmatpush.msra.mxu0 0.0
    %789 = vmatpush.msra.mxu0 %v619
    %790 = vmatpush.msra.mxu0 %v618
    %791 = vmatmul.f32.gmra.mxu0 %v773
    %v792 = vpop.f32.mrf.mxu0
    %v793 = vadd.f32 %v620, %v792
    %794 = vdwg.mxu0
    %v795 = vsel %vm515, %v793, 0.0
    %796 = vadd.xlane.f32.xlu0 %v795
    %v797 = vpop.xlane.xlu0 %796
    %v798 = vmul.f32 %v797, %v650
    %v799 = vsub.f32 %v793, %v798
    %v800 = vmul.f32 %v799, %v799
    %v801 = vsel %vm515, %v800, 0.0
    %802 = vadd.xlane.f32.xlu0 %v801
    %v803 = vpop.xlane.xlu0 %802
    %v804 = vmul.f32 %v803, %v650
    %v805 = vadd.f32 %v804, 1e-05
    %v806 = vrsqrt.pop %v805
    %v807 = vmul.f32 %v806, %v805
    %v808 = vmul.f32 %v807, %v806
    %v809 = vmul.f32 0.5, %v808
    %v810 = vsub.f32 1.5, %v809
    %v811 = vmul.f32 %v806, %v810
    %vm812 = vweird.f32 %v805
    %vm813 = vweird.f32 %v806
    %vm814 = vmor %vm812, %vm813
    %v815 = vsel %vm814, %v806, %v811
    %v816 = vmul.f32 %v799, %v815
    %v817 = vmul.f32 %v816, %v670
    %v818 = vadd.f32 %v817, %v672
    %v819 = vmax.f32 %v818, 0.0
    %v821 = vsel %vm457, %v819, 0
    %823 = vmatpush.msra.mxu0 0.0
    %824 = vmatpush.msra.mxu0 0.0
    %825 = vmatpush.msra.mxu0 0.0
    %826 = vmatpush.msra.mxu0 0.0
    %827 = vmatpush.msra.mxu0 0.0
    %828 = vmatpush.msra.mxu0 0.0
    %829 = vmatpush.msra.mxu0 0.0
    %830 = vmatpush.msra.mxu0 0.0
    %831 = vmatpush.msra.mxu0 0.0
    %832 = vmatpush.msra.mxu0 0.0
    %833 = vmatpush.msra.mxu0 0.0
    %834 = vmatpush.msra.mxu0 0.0
    %835 = vmatpush.msra.mxu0 0.0
    %836 = vmatpush.msra.mxu0 0.0
    %837 = vmatpush.msra.mxu0 0.0
    %838 = vmatpush.msra.mxu0 %v681
    %839 = vmatmul.f32.gmra.mxu0 %v821
    %v840 = vpop.f32.mrf.mxu0
    %v841 = vadd.f32 %v676, %v840
    %842 = vdwg.mxu0
    %v843 = vsel %vm703, %v841, 0.0
    %844 = vadd.xlane.f32.xlu0 %v843
    %v845 = vpop.xlane.xlu0 %844
    %v846 = vmul.f32 %v845, %v713
    %v847 = vsub.f32 %v841, %v846
    %v848 = vmul.f32 %v847, %v847
    %v849 = vsel %vm703, %v848, 0.0
    %850 = vadd.xlane.f32.xlu0 %v849
    %v851 = vpop.xlane.xlu0 %850
    %v852 = vmul.f32 %v851, %v713
    %v853 = vadd.f32 %v852, 1e-05
    %v854 = vrsqrt.pop %v853
    %v855 = vmul.f32 %v854, %v853
    %v856 = vmul.f32 %v855, %v854
    %v857 = vmul.f32 0.5, %v856
    %v858 = vsub.f32 1.5, %v857
    %v859 = vmul.f32 %v854, %v858
    %vm860 = vweird.f32 %v853
    %vm861 = vweird.f32 %v854
    %vm862 = vmor %vm860, %vm861
    %v863 = vsel %vm862, %v854, %v859
    %v864 = vmul.f32 %v847, %v863
    %v865 = vmul.f32 %v864, %v733
    %v866 = vadd.f32 %v865, %v735
    %v867 = vxor.u32 %v866, 2147483648
    %v868 = vmul.f32 %v867, 1.442695
    %v869 = vpow.pop %v868
    %v870 = vadd.f32 %v869, 1.0
    %v871 = vrcp.pop %v870
    %v872 = vmul.f32 %v870, %v871
    %v873 = vsub.f32 1.0, %v872
    %v874 = vmul.f32 %v871, %v873
    %v875 = vadd.f32 %v871, %v874
    %vm876 = vweird.f32 %v870
    %vm877 = vweird.f32 %v871
    %vm878 = vmor %vm876, %vm877
    %v879 = vsel %vm878, %v871, %v875
    %v880 = vand.u32 2147483647, %v870
    %vm881 = vcmp.eq.f32.partialorder %v880, 8.507059e+37
    %v882 = vand.u32 %v870, 2147483648
    %v883 = vor.u32 1.1754944e-38, %v882
    %v884 = vsel %vm881, %v883, %v879
    %v885 = vmul.f32 1.0, %v884
    %v886 = vadd.f32 %v755, %v885
    %888 = vset.pattern.permute.xlu0 0
    %889 = vperm.xlu0 %888, %v611
    %v890 = vpop.permute.xlu0 %889
    %v892 = vmul.f32 %v886, %v890
    %v893 = vadd.f32 %v892, 0.0
    %s894 = scalar_lea.vmem %s4, 16
    %v895 = vld [vmem:[%s894] sm:$0xff]
    %v896 = vld [vmem:[%s894 + $0x8] sm:$0xff]
    %v897 = vperm.slane %v612, 1
    %898 = vmatpush.msra.mxu0 0.0
    %899 = vmatpush.msra.mxu0 0.0
    %900 = vmatpush.msra.mxu0 0.0
    %901 = vmatpush.msra.mxu0 0.0
    %902 = vmatpush.msra.mxu0 0.0
    %903 = vmatpush.msra.mxu0 0.0
    %904 = vmatpush.msra.mxu0 0.0
    %905 = vmatpush.msra.mxu0 0.0
    %906 = vmatpush.msra.mxu0 0.0
    %907 = vmatpush.msra.mxu0 0.0
    %908 = vmatpush.msra.mxu0 0.0
    %909 = vmatpush.msra.mxu0 0.0
    %910 = vmatpush.msra.mxu0 0.0
    %911 = vmatpush.msra.mxu0 0.0
    %912 = vmatpush.msra.mxu0 %v896
    %913 = vmatpush.msra.mxu0 %v895
    %914 = vmatmul.f32.gmra.mxu0 %v166
    %v915 = vpop.f32.mrf.mxu0
    %v916 = vadd.f32 %v897, %v915
    %917 = vdwg.mxu0
    %v918 = vsel %vm515, %v916, 0.0
    %919 = vadd.xlane.f32.xlu0 %v918
    %v920 = vpop.xlane.xlu0 %919
    %v921 = vmul.f32 %v920, %v650
    %v922 = vsub.f32 %v916, %v921
    %v923 = vmul.f32 %v922, %v922
    %v924 = vsel %vm515, %v923, 0.0
    %925 = vadd.xlane.f32.xlu0 %v924
    %v926 = vpop.xlane.xlu0 %925
    %v927 = vmul.f32 %v926, %v650
    %v928 = vadd.f32 %v927, 1e-05
    %v929 = vrsqrt.pop %v928
    %v930 = vmul.f32 %v929, %v928
    %v931 = vmul.f32 %v930, %v929
    %v932 = vmul.f32 0.5, %v931
    %v933 = vsub.f32 1.5, %v932
    %v934 = vmul.f32 %v929, %v933
    %vm935 = vweird.f32 %v928
    %vm936 = vweird.f32 %v929
    %vm937 = vmor %vm935, %vm936
    %v938 = vsel %vm937, %v929, %v934
    %v939 = vmul.f32 %v922, %v938
    %v940 = vperm.slane %v613, 1
    %v941 = vmul.f32 %v939, %v940
    %v942 = vperm.slane %v614, 1
    %v943 = vadd.f32 %v941, %v942
    %v944 = vmax.f32 %v943, 0.0
    %s945 = scalar_lea.vmem %s8, 4
    %v946 = vld [vmem:[%s945] sm:$0xf]
    %v947 = vperm.slane %v615, 1
    %v949 = vsel %vm457, %v944, 0
    %v952 = vsel %vm236, %v946, 0
    %954 = vmatpush.msra.mxu0 0.0
    %955 = vmatpush.msra.mxu0 0.0
    %956 = vmatpush.msra.mxu0 0.0
    %957 = vmatpush.msra.mxu0 0.0
    %958 = vmatpush.msra.mxu0 0.0
    %959 = vmatpush.msra.mxu0 0.0
    %960 = vmatpush.msra.mxu0 0.0
    %961 = vmatpush.msra.mxu0 0.0
    %962 = vmatpush.msra.mxu0 0.0
    %963 = vmatpush.msra.mxu0 0.0
    %964 = vmatpush.msra.mxu0 0.0
    %965 = vmatpush.msra.mxu0 0.0
    %966 = vmatpush.msra.mxu0 0.0
    %967 = vmatpush.msra.mxu0 0.0
    %968 = vmatpush.msra.mxu0 0.0
    %969 = vmatpush.msra.mxu0 %v952
    %970 = vmatmul.f32.gmra.mxu0 %v949
    %v971 = vpop.f32.mrf.mxu0
    %v972 = vadd.f32 %v947, %v971
    %973 = vdwg.mxu0
    %v974 = vsel %vm703, %v972, 0.0
    %975 = vadd.xlane.f32.xlu0 %v974
    %v976 = vpop.xlane.xlu0 %975
    %v977 = vmul.f32 %v976, %v713
    %v978 = vsub.f32 %v972, %v977
    %v979 = vmul.f32 %v978, %v978
    %v980 = vsel %vm703, %v979, 0.0
    %981 = vadd.xlane.f32.xlu0 %v980
    %v982 = vpop.xlane.xlu0 %981
    %v983 = vmul.f32 %v982, %v713
    %v984 = vadd.f32 %v983, 1e-05
    %v985 = vrsqrt.pop %v984
    %v986 = vmul.f32 %v985, %v984
    %v987 = vmul.f32 %v986, %v985
    %v988 = vmul.f32 0.5, %v987
    %v989 = vsub.f32 1.5, %v988
    %v990 = vmul.f32 %v985, %v989
    %vm991 = vweird.f32 %v984
    %vm992 = vweird.f32 %v985
    %vm993 = vmor %vm991, %vm992
    %v994 = vsel %vm993, %v985, %v990
    %v995 = vmul.f32 %v978, %v994
    %v996 = vperm.slane %v616, 1
    %v997 = vmul.f32 %v995, %v996
    %v998 = vperm.slane %v617, 1
    %v999 = vadd.f32 %v997, %v998
    %v1000 = vxor.u32 %v999, 2147483648
    %v1001 = vmul.f32 %v1000, 1.442695
    %v1002 = vpow.pop %v1001
    %v1003 = vadd.f32 %v1002, 1.0
    %v1004 = vrcp.pop %v1003
    %v1005 = vmul.f32 %v1003, %v1004
    %v1006 = vsub.f32 1.0, %v1005
    %v1007 = vmul.f32 %v1004, %v1006
    %v1008 = vadd.f32 %v1004, %v1007
    %vm1009 = vweird.f32 %v1003
    %vm1010 = vweird.f32 %v1004
    %vm1011 = vmor %vm1009, %vm1010
    %v1012 = vsel %vm1011, %v1004, %v1008
    %v1013 = vand.u32 2147483647, %v1003
    %vm1014 = vcmp.eq.f32.partialorder %v1013, 8.507059e+37
    %v1015 = vand.u32 %v1003, 2147483648
    %v1016 = vor.u32 1.1754944e-38, %v1015
    %v1017 = vsel %vm1014, %v1016, %v1012
    %v1018 = vmul.f32 1.0, %v1017
    %1019 = vmatpush.msra.mxu0 0.0
    %1020 = vmatpush.msra.mxu0 0.0
    %1021 = vmatpush.msra.mxu0 0.0
    %1022 = vmatpush.msra.mxu0 0.0
    %1023 = vmatpush.msra.mxu0 0.0
    %1024 = vmatpush.msra.mxu0 0.0
    %1025 = vmatpush.msra.mxu0 0.0
    %1026 = vmatpush.msra.mxu0 0.0
    %1027 = vmatpush.msra.mxu0 0.0
    %1028 = vmatpush.msra.mxu0 0.0
    %1029 = vmatpush.msra.mxu0 0.0
    %1030 = vmatpush.msra.mxu0 0.0
    %1031 = vmatpush.msra.mxu0 0.0
    %1032 = vmatpush.msra.mxu0 0.0
    %1033 = vmatpush.msra.mxu0 %v896
    %1034 = vmatpush.msra.mxu0 %v895
    %1035 = vmatmul.f32.gmra.mxu0 %v773
    %v1036 = vpop.f32.mrf.mxu0
    %v1037 = vadd.f32 %v897, %v1036
    %1038 = vdwg.mxu0
    %v1039 = vsel %vm515, %v1037, 0.0
    %1040 = vadd.xlane.f32.xlu0 %v1039
    %v1041 = vpop.xlane.xlu0 %1040
    %v1042 = vmul.f32 %v1041, %v650
    %v1043 = vsub.f32 %v1037, %v1042
    %v1044 = vmul.f32 %v1043, %v1043
    %v1045 = vsel %vm515, %v1044, 0.0
    %1046 = vadd.xlane.f32.xlu0 %v1045
    %v1047 = vpop.xlane.xlu0 %1046
    %v1048 = vmul.f32 %v1047, %v650
    %v1049 = vadd.f32 %v1048, 1e-05
    %v1050 = vrsqrt.pop %v1049
    %v1051 = vmul.f32 %v1050, %v1049
    %v1052 = vmul.f32 %v1051, %v1050
    %v1053 = vmul.f32 0.5, %v1052
    %v1054 = vsub.f32 1.5, %v1053
    %v1055 = vmul.f32 %v1050, %v1054
    %vm1056 = vweird.f32 %v1049
    %vm1057 = vweird.f32 %v1050
    %vm1058 = vmor %vm1056, %vm1057
    %v1059 = vsel %vm1058, %v1050, %v1055
    %v1060 = vmul.f32 %v1043, %v1059
    %v1061 = vmul.f32 %v1060, %v940
    %v1062 = vadd.f32 %v1061, %v942
    %v1063 = vmax.f32 %v1062, 0.0
    %v1065 = vsel %vm457, %v1063, 0
    %1067 = vmatpush.msra.mxu0 0.0
    %1068 = vmatpush.msra.mxu0 0.0
    %1069 = vmatpush.msra.mxu0 0.0
    %1070 = vmatpush.msra.mxu0 0.0
    %1071 = vmatpush.msra.mxu0 0.0
    %1072 = vmatpush.msra.mxu0 0.0
    %1073 = vmatpush.msra.mxu0 0.0
    %1074 = vmatpush.msra.mxu0 0.0
    %1075 = vmatpush.msra.mxu0 0.0
    %1076 = vmatpush.msra.mxu0 0.0
    %1077 = vmatpush.msra.mxu0 0.0
    %1078 = vmatpush.msra.mxu0 0.0
    %1079 = vmatpush.msra.mxu0 0.0
    %1080 = vmatpush.msra.mxu0 0.0
    %1081 = vmatpush.msra.mxu0 0.0
    %1082 = vmatpush.msra.mxu0 %v952
    %1083 = vmatmul.f32.gmra.mxu0 %v1065
    %v1084 = vpop.f32.mrf.mxu0
    %v1085 = vadd.f32 %v947, %v1084
    %1086 = vdwg.mxu0
    %v1087 = vsel %vm703, %v1085, 0.0
    %1088 = vadd.xlane.f32.xlu0 %v1087
    %v1089 = vpop.xlane.xlu0 %1088
    %v1090 = vmul.f32 %v1089, %v713
    %v1091 = vsub.f32 %v1085, %v1090
    %v1092 = vmul.f32 %v1091, %v1091
    %v1093 = vsel %vm703, %v1092, 0.0
    %1094 = vadd.xlane.f32.xlu0 %v1093
    %v1095 = vpop.xlane.xlu0 %1094
    %v1096 = vmul.f32 %v1095, %v713
    %v1097 = vadd.f32 %v1096, 1e-05
    %v1098 = vrsqrt.pop %v1097
    %v1099 = vmul.f32 %v1098, %v1097
    %v1100 = vmul.f32 %v1099, %v1098
    %v1101 = vmul.f32 0.5, %v1100
    %v1102 = vsub.f32 1.5, %v1101
    %v1103 = vmul.f32 %v1098, %v1102
    %vm1104 = vweird.f32 %v1097
    %vm1105 = vweird.f32 %v1098
    %vm1106 = vmor %vm1104, %vm1105
    %v1107 = vsel %vm1106, %v1098, %v1103
    %v1108 = vmul.f32 %v1091, %v1107
    %v1109 = vmul.f32 %v1108, %v996
    %v1110 = vadd.f32 %v1109, %v998
    %v1111 = vxor.u32 %v1110, 2147483648
    %v1112 = vmul.f32 %v1111, 1.442695
    %v1113 = vpow.pop %v1112
    %v1114 = vadd.f32 %v1113, 1.0
    %v1115 = vrcp.pop %v1114
    %v1116 = vmul.f32 %v1114, %v1115
    %v1117 = vsub.f32 1.0, %v1116
    %v1118 = vmul.f32 %v1115, %v1117
    %v1119 = vadd.f32 %v1115, %v1118
    %vm1120 = vweird.f32 %v1114
    %vm1121 = vweird.f32 %v1115
    %vm1122 = vmor %vm1120, %vm1121
    %v1123 = vsel %vm1122, %v1115, %v1119
    %v1124 = vand.u32 2147483647, %v1114
    %vm1125 = vcmp.eq.f32.partialorder %v1124, 8.507059e+37
    %v1126 = vand.u32 %v1114, 2147483648
    %v1127 = vor.u32 1.1754944e-38, %v1126
    %v1128 = vsel %vm1125, %v1127, %v1123
    %v1129 = vmul.f32 1.0, %v1128
    %v1130 = vadd.f32 %v1018, %v1129
    %1131 = vset.pattern.permute.xlu0 1
    %1132 = vperm.xlu0 %1131, %v611
    %v1133 = vpop.permute.xlu0 %1132
    %v1135 = vmul.f32 %v1130, %v1133
    %v1136 = vadd.f32 %v893, %v1135
    %s1137 = scalar_lea.vmem %s4, 32
    %v1138 = vld [vmem:[%s1137] sm:$0xff]
    %v1139 = vld [vmem:[%s1137 + $0x8] sm:$0xff]
    %v1140 = vperm.slane %v612, 2
    %1141 = vmatpush.msra.mxu0 0.0
    %1142 = vmatpush.msra.mxu0 0.0
    %1143 = vmatpush.msra.mxu0 0.0
    %1144 = vmatpush.msra.mxu0 0.0
    %1145 = vmatpush.msra.mxu0 0.0
    %1146 = vmatpush.msra.mxu0 0.0
    %1147 = vmatpush.msra.mxu0 0.0
    %1148 = vmatpush.msra.mxu0 0.0
    %1149 = vmatpush.msra.mxu0 0.0
    %1150 = vmatpush.msra.mxu0 0.0
    %1151 = vmatpush.msra.mxu0 0.0
    %1152 = vmatpush.msra.mxu0 0.0
    %1153 = vmatpush.msra.mxu0 0.0
    %1154 = vmatpush.msra.mxu0 0.0
    %1155 = vmatpush.msra.mxu0 %v1139
    %1156 = vmatpush.msra.mxu0 %v1138
    %1157 = vmatmul.f32.gmra.mxu0 %v166
    %v1158 = vpop.f32.mrf.mxu0
    %v1159 = vadd.f32 %v1140, %v1158
    %1160 = vdwg.mxu0
    %v1161 = vsel %vm515, %v1159, 0.0
    %1162 = vadd.xlane.f32.xlu0 %v1161
    %v1163 = vpop.xlane.xlu0 %1162
    %v1164 = vmul.f32 %v1163, %v650
    %v1165 = vsub.f32 %v1159, %v1164
    %v1166 = vmul.f32 %v1165, %v1165
    %v1167 = vsel %vm515, %v1166, 0.0
    %1168 = vadd.xlane.f32.xlu0 %v1167
    %v1169 = vpop.xlane.xlu0 %1168
    %v1170 = vmul.f32 %v1169, %v650
    %v1171 = vadd.f32 %v1170, 1e-05
    %v1172 = vrsqrt.pop %v1171
    %v1173 = vmul.f32 %v1172, %v1171
    %v1174 = vmul.f32 %v1173, %v1172
    %v1175 = vmul.f32 0.5, %v1174
    %v1176 = vsub.f32 1.5, %v1175
    %v1177 = vmul.f32 %v1172, %v1176
    %vm1178 = vweird.f32 %v1171
    %vm1179 = vweird.f32 %v1172
    %vm1180 = vmor %vm1178, %vm1179
    %v1181 = vsel %vm1180, %v1172, %v1177
    %v1182 = vmul.f32 %v1165, %v1181
    %v1183 = vperm.slane %v613, 2
    %v1184 = vmul.f32 %v1182, %v1183
    %v1185 = vperm.slane %v614, 2
    %v1186 = vadd.f32 %v1184, %v1185
    %v1187 = vmax.f32 %v1186, 0.0
    %s1188 = scalar_lea.vmem %s8, 8
    %v1189 = vld [vmem:[%s1188] sm:$0xf]
    %v1190 = vperm.slane %v615, 2
    %v1192 = vsel %vm457, %v1187, 0
    %v1195 = vsel %vm236, %v1189, 0
    %1197 = vmatpush.msra.mxu0 0.0
    %1198 = vmatpush.msra.mxu0 0.0
    %1199 = vmatpush.msra.mxu0 0.0
    %1200 = vmatpush.msra.mxu0 0.0
    %1201 = vmatpush.msra.mxu0 0.0
    %1202 = vmatpush.msra.mxu0 0.0
    %1203 = vmatpush.msra.mxu0 0.0
    %1204 = vmatpush.msra.mxu0 0.0
    %1205 = vmatpush.msra.mxu0 0.0
    %1206 = vmatpush.msra.mxu0 0.0
    %1207 = vmatpush.msra.mxu0 0.0
    %1208 = vmatpush.msra.mxu0 0.0
    %1209 = vmatpush.msra.mxu0 0.0
    %1210 = vmatpush.msra.mxu0 0.0
    %1211 = vmatpush.msra.mxu0 0.0
    %1212 = vmatpush.msra.mxu0 %v1195
    %1213 = vmatmul.f32.gmra.mxu0 %v1192
    %v1214 = vpop.f32.mrf.mxu0
    %v1215 = vadd.f32 %v1190, %v1214
    %1216 = vdwg.mxu0
    %v1217 = vsel %vm703, %v1215, 0.0
    %1218 = vadd.xlane.f32.xlu0 %v1217
    %v1219 = vpop.xlane.xlu0 %1218
    %v1220 = vmul.f32 %v1219, %v713
    %v1221 = vsub.f32 %v1215, %v1220
    %v1222 = vmul.f32 %v1221, %v1221
    %v1223 = vsel %vm703, %v1222, 0.0
    %1224 = vadd.xlane.f32.xlu0 %v1223
    %v1225 = vpop.xlane.xlu0 %1224
    %v1226 = vmul.f32 %v1225, %v713
    %v1227 = vadd.f32 %v1226, 1e-05
    %v1228 = vrsqrt.pop %v1227
    %v1229 = vmul.f32 %v1228, %v1227
    %v1230 = vmul.f32 %v1229, %v1228
    %v1231 = vmul.f32 0.5, %v1230
    %v1232 = vsub.f32 1.5, %v1231
    %v1233 = vmul.f32 %v1228, %v1232
    %vm1234 = vweird.f32 %v1227
    %vm1235 = vweird.f32 %v1228
    %vm1236 = vmor %vm1234, %vm1235
    %v1237 = vsel %vm1236, %v1228, %v1233
    %v1238 = vmul.f32 %v1221, %v1237
    %v1239 = vperm.slane %v616, 2
    %v1240 = vmul.f32 %v1238, %v1239
    %v1241 = vperm.slane %v617, 2
    %v1242 = vadd.f32 %v1240, %v1241
    %v1243 = vxor.u32 %v1242, 2147483648
    %v1244 = vmul.f32 %v1243, 1.442695
    %v1245 = vpow.pop %v1244
    %v1246 = vadd.f32 %v1245, 1.0
    %v1247 = vrcp.pop %v1246
    %v1248 = vmul.f32 %v1246, %v1247
    %v1249 = vsub.f32 1.0, %v1248
    %v1250 = vmul.f32 %v1247, %v1249
    %v1251 = vadd.f32 %v1247, %v1250
    %vm1252 = vweird.f32 %v1246
    %vm1253 = vweird.f32 %v1247
    %vm1254 = vmor %vm1252, %vm1253
    %v1255 = vsel %vm1254, %v1247, %v1251
    %v1256 = vand.u32 2147483647, %v1246
    %vm1257 = vcmp.eq.f32.partialorder %v1256, 8.507059e+37
    %v1258 = vand.u32 %v1246, 2147483648
    %v1259 = vor.u32 1.1754944e-38, %v1258
    %v1260 = vsel %vm1257, %v1259, %v1255
    %v1261 = vmul.f32 1.0, %v1260
    %1262 = vmatpush.msra.mxu0 0.0
    %1263 = vmatpush.msra.mxu0 0.0
    %1264 = vmatpush.msra.mxu0 0.0
    %1265 = vmatpush.msra.mxu0 0.0
    %1266 = vmatpush.msra.mxu0 0.0
    %1267 = vmatpush.msra.mxu0 0.0
    %1268 = vmatpush.msra.mxu0 0.0
    %1269 = vmatpush.msra.mxu0 0.0
    %1270 = vmatpush.msra.mxu0 0.0
    %1271 = vmatpush.msra.mxu0 0.0
    %1272 = vmatpush.msra.mxu0 0.0
    %1273 = vmatpush.msra.mxu0 0.0
    %1274 = vmatpush.msra.mxu0 0.0
    %1275 = vmatpush.msra.mxu0 0.0
    %1276 = vmatpush.msra.mxu0 %v1139
    %1277 = vmatpush.msra.mxu0 %v1138
    %1278 = vmatmul.f32.gmra.mxu0 %v773
    %v1279 = vpop.f32.mrf.mxu0
    %v1280 = vadd.f32 %v1140, %v1279
    %1281 = vdwg.mxu0
    %v1282 = vsel %vm515, %v1280, 0.0
    %1283 = vadd.xlane.f32.xlu0 %v1282
    %v1284 = vpop.xlane.xlu0 %1283
    %v1285 = vmul.f32 %v1284, %v650
    %v1286 = vsub.f32 %v1280, %v1285
    %v1287 = vmul.f32 %v1286, %v1286
    %v1288 = vsel %vm515, %v1287, 0.0
    %1289 = vadd.xlane.f32.xlu0 %v1288
    %v1290 = vpop.xlane.xlu0 %1289
    %v1291 = vmul.f32 %v1290, %v650
    %v1292 = vadd.f32 %v1291, 1e-05
    %v1293 = vrsqrt.pop %v1292
    %v1294 = vmul.f32 %v1293, %v1292
    %v1295 = vmul.f32 %v1294, %v1293
    %v1296 = vmul.f32 0.5, %v1295
    %v1297 = vsub.f32 1.5, %v1296
    %v1298 = vmul.f32 %v1293, %v1297
    %vm1299 = vweird.f32 %v1292
    %vm1300 = vweird.f32 %v1293
    %vm1301 = vmor %vm1299, %vm1300
    %v1302 = vsel %vm1301, %v1293, %v1298
    %v1303 = vmul.f32 %v1286, %v1302
    %v1304 = vmul.f32 %v1303, %v1183
    %v1305 = vadd.f32 %v1304, %v1185
    %v1306 = vmax.f32 %v1305, 0.0
    %v1308 = vsel %vm457, %v1306, 0
    %1310 = vmatpush.msra.mxu0 0.0
    %1311 = vmatpush.msra.mxu0 0.0
    %1312 = vmatpush.msra.mxu0 0.0
    %1313 = vmatpush.msra.mxu0 0.0
    %1314 = vmatpush.msra.mxu0 0.0
    %1315 = vmatpush.msra.mxu0 0.0
    %1316 = vmatpush.msra.mxu0 0.0
    %1317 = vmatpush.msra.mxu0 0.0
    %1318 = vmatpush.msra.mxu0 0.0
    %1319 = vmatpush.msra.mxu0 0.0
    %1320 = vmatpush.msra.mxu0 0.0
    %1321 = vmatpush.msra.mxu0 0.0
    %1322 = vmatpush.msra.mxu0 0.0
    %1323 = vmatpush.msra.mxu0 0.0
    %1324 = vmatpush.msra.mxu0 0.0
    %1325 = vmatpush.msra.mxu0 %v1195
    %1326 = vmatmul.f32.gmra.mxu0 %v1308
    %v1327 = vpop.f32.mrf.mxu0
    %v1328 = vadd.f32 %v1190, %v1327
    %1329 = vdwg.mxu0
    %v1330 = vsel %vm703, %v1328, 0.0
    %1331 = vadd.xlane.f32.xlu0 %v1330
    %v1332 = vpop.xlane.xlu0 %1331
    %v1333 = vmul.f32 %v1332, %v713
    %v1334 = vsub.f32 %v1328, %v1333
    %v1335 = vmul.f32 %v1334, %v1334
    %v1336 = vsel %vm703, %v1335, 0.0
    %1337 = vadd.xlane.f32.xlu0 %v1336
    %v1338 = vpop.xlane.xlu0 %1337
    %v1339 = vmul.f32 %v1338, %v713
    %v1340 = vadd.f32 %v1339, 1e-05
    %v1341 = vrsqrt.pop %v1340
    %v1342 = vmul.f32 %v1341, %v1340
    %v1343 = vmul.f32 %v1342, %v1341
    %v1344 = vmul.f32 0.5, %v1343
    %v1345 = vsub.f32 1.5, %v1344
    %v1346 = vmul.f32 %v1341, %v1345
    %vm1347 = vweird.f32 %v1340
    %vm1348 = vweird.f32 %v1341
    %vm1349 = vmor %vm1347, %vm1348
    %v1350 = vsel %vm1349, %v1341, %v1346
    %v1351 = vmul.f32 %v1334, %v1350
    %v1352 = vmul.f32 %v1351, %v1239
    %v1353 = vadd.f32 %v1352, %v1241
    %v1354 = vxor.u32 %v1353, 2147483648
    %v1355 = vmul.f32 %v1354, 1.442695
    %v1356 = vpow.pop %v1355
    %v1357 = vadd.f32 %v1356, 1.0
    %v1358 = vrcp.pop %v1357
    %v1359 = vmul.f32 %v1357, %v1358
    %v1360 = vsub.f32 1.0, %v1359
    %v1361 = vmul.f32 %v1358, %v1360
    %v1362 = vadd.f32 %v1358, %v1361
    %vm1363 = vweird.f32 %v1357
    %vm1364 = vweird.f32 %v1358
    %vm1365 = vmor %vm1363, %vm1364
    %v1366 = vsel %vm1365, %v1358, %v1362
    %v1367 = vand.u32 2147483647, %v1357
    %vm1368 = vcmp.eq.f32.partialorder %v1367, 8.507059e+37
    %v1369 = vand.u32 %v1357, 2147483648
    %v1370 = vor.u32 1.1754944e-38, %v1369
    %v1371 = vsel %vm1368, %v1370, %v1366
    %v1372 = vmul.f32 1.0, %v1371
    %v1373 = vadd.f32 %v1261, %v1372
    %1374 = vset.pattern.permute.xlu0 2
    %1375 = vperm.xlu0 %1374, %v611
    %v1376 = vpop.permute.xlu0 %1375
    %v1378 = vmul.f32 %v1373, %v1376
    %v1379 = vadd.f32 %v1136, %v1378
    %s1380 = scalar_lea.vmem %s4, 48
    %v1381 = vld [vmem:[%s1380] sm:$0xff]
    %v1382 = vld [vmem:[%s1380 + $0x8] sm:$0xff]
    %v1383 = vperm.slane %v612, 3
    %1384 = vmatpush.msra.mxu0 0.0
    %1385 = vmatpush.msra.mxu0 0.0
    %1386 = vmatpush.msra.mxu0 0.0
    %1387 = vmatpush.msra.mxu0 0.0
    %1388 = vmatpush.msra.mxu0 0.0
    %1389 = vmatpush.msra.mxu0 0.0
    %1390 = vmatpush.msra.mxu0 0.0
    %1391 = vmatpush.msra.mxu0 0.0
    %1392 = vmatpush.msra.mxu0 0.0
    %1393 = vmatpush.msra.mxu0 0.0
    %1394 = vmatpush.msra.mxu0 0.0
    %1395 = vmatpush.msra.mxu0 0.0
    %1396 = vmatpush.msra.mxu0 0.0
    %1397 = vmatpush.msra.mxu0 0.0
    %1398 = vmatpush.msra.mxu0 %v1382
    %1399 = vmatpush.msra.mxu0 %v1381
    %1400 = vmatmul.f32.gmra.mxu0 %v166
    %v1401 = vpop.f32.mrf.mxu0
    %v1402 = vadd.f32 %v1383, %v1401
    %1403 = vdwg.mxu0
    %v1404 = vsel %vm515, %v1402, 0.0
    %1405 = vadd.xlane.f32.xlu0 %v1404
    %v1406 = vpop.xlane.xlu0 %1405
    %v1407 = vmul.f32 %v1406, %v650
    %v1408 = vsub.f32 %v1402, %v1407
    %v1409 = vmul.f32 %v1408, %v1408
    %v1410 = vsel %vm515, %v1409, 0.0
    %1411 = vadd.xlane.f32.xlu0 %v1410
    %v1412 = vpop.xlane.xlu0 %1411
    %v1413 = vmul.f32 %v1412, %v650
    %v1414 = vadd.f32 %v1413, 1e-05
    %v1415 = vrsqrt.pop %v1414
    %v1416 = vmul.f32 %v1415, %v1414
    %v1417 = vmul.f32 %v1416, %v1415
    %v1418 = vmul.f32 0.5, %v1417
    %v1419 = vsub.f32 1.5, %v1418
    %v1420 = vmul.f32 %v1415, %v1419
    %vm1421 = vweird.f32 %v1414
    %vm1422 = vweird.f32 %v1415
    %vm1423 = vmor %vm1421, %vm1422
    %v1424 = vsel %vm1423, %v1415, %v1420
    %v1425 = vmul.f32 %v1408, %v1424
    %v1426 = vperm.slane %v613, 3
    %v1427 = vmul.f32 %v1425, %v1426
    %v1428 = vperm.slane %v614, 3
    %v1429 = vadd.f32 %v1427, %v1428
    %v1430 = vmax.f32 %v1429, 0.0
    %s1431 = scalar_lea.vmem %s8, 12
    %v1432 = vld [vmem:[%s1431] sm:$0xf]
    %v1433 = vperm.slane %v615, 3
    %v1435 = vsel %vm457, %v1430, 0
    %v1438 = vsel %vm236, %v1432, 0
    %1440 = vmatpush.msra.mxu0 0.0
    %1441 = vmatpush.msra.mxu0 0.0
    %1442 = vmatpush.msra.mxu0 0.0
    %1443 = vmatpush.msra.mxu0 0.0
    %1444 = vmatpush.msra.mxu0 0.0
    %1445 = vmatpush.msra.mxu0 0.0
    %1446 = vmatpush.msra.mxu0 0.0
    %1447 = vmatpush.msra.mxu0 0.0
    %1448 = vmatpush.msra.mxu0 0.0
    %1449 = vmatpush.msra.mxu0 0.0
    %1450 = vmatpush.msra.mxu0 0.0
    %1451 = vmatpush.msra.mxu0 0.0
    %1452 = vmatpush.msra.mxu0 0.0
    %1453 = vmatpush.msra.mxu0 0.0
    %1454 = vmatpush.msra.mxu0 0.0
    %1455 = vmatpush.msra.mxu0 %v1438
    %1456 = vmatmul.f32.gmra.mxu0 %v1435
    %v1457 = vpop.f32.mrf.mxu0
    %v1458 = vadd.f32 %v1433, %v1457
    %1459 = vdwg.mxu0
    %v1460 = vsel %vm703, %v1458, 0.0
    %1461 = vadd.xlane.f32.xlu0 %v1460
    %v1462 = vpop.xlane.xlu0 %1461
    %v1463 = vmul.f32 %v1462, %v713
    %v1464 = vsub.f32 %v1458, %v1463
    %v1465 = vmul.f32 %v1464, %v1464
    %v1466 = vsel %vm703, %v1465, 0.0
    %1467 = vadd.xlane.f32.xlu0 %v1466
    %v1468 = vpop.xlane.xlu0 %1467
    %v1469 = vmul.f32 %v1468, %v713
    %v1470 = vadd.f32 %v1469, 1e-05
    %v1471 = vrsqrt.pop %v1470
    %v1472 = vmul.f32 %v1471, %v1470
    %v1473 = vmul.f32 %v1472, %v1471
    %v1474 = vmul.f32 0.5, %v1473
    %v1475 = vsub.f32 1.5, %v1474
    %v1476 = vmul.f32 %v1471, %v1475
    %vm1477 = vweird.f32 %v1470
    %vm1478 = vweird.f32 %v1471
    %vm1479 = vmor %vm1477, %vm1478
    %v1480 = vsel %vm1479, %v1471, %v1476
    %v1481 = vmul.f32 %v1464, %v1480
    %v1482 = vperm.slane %v616, 3
    %v1483 = vmul.f32 %v1481, %v1482
    %v1484 = vperm.slane %v617, 3
    %v1485 = vadd.f32 %v1483, %v1484
    %v1486 = vxor.u32 %v1485, 2147483648
    %v1487 = vmul.f32 %v1486, 1.442695
    %v1488 = vpow.pop %v1487
    %v1489 = vadd.f32 %v1488, 1.0
    %v1490 = vrcp.pop %v1489
    %v1491 = vmul.f32 %v1489, %v1490
    %v1492 = vsub.f32 1.0, %v1491
    %v1493 = vmul.f32 %v1490, %v1492
    %v1494 = vadd.f32 %v1490, %v1493
    %vm1495 = vweird.f32 %v1489
    %vm1496 = vweird.f32 %v1490
    %vm1497 = vmor %vm1495, %vm1496
    %v1498 = vsel %vm1497, %v1490, %v1494
    %v1499 = vand.u32 2147483647, %v1489
    %vm1500 = vcmp.eq.f32.partialorder %v1499, 8.507059e+37
    %v1501 = vand.u32 %v1489, 2147483648
    %v1502 = vor.u32 1.1754944e-38, %v1501
    %v1503 = vsel %vm1500, %v1502, %v1498
    %v1504 = vmul.f32 1.0, %v1503
    %1505 = vmatpush.msra.mxu0 0.0
    %1506 = vmatpush.msra.mxu0 0.0
    %1507 = vmatpush.msra.mxu0 0.0
    %1508 = vmatpush.msra.mxu0 0.0
    %1509 = vmatpush.msra.mxu0 0.0
    %1510 = vmatpush.msra.mxu0 0.0
    %1511 = vmatpush.msra.mxu0 0.0
    %1512 = vmatpush.msra.mxu0 0.0
    %1513 = vmatpush.msra.mxu0 0.0
    %1514 = vmatpush.msra.mxu0 0.0
    %1515 = vmatpush.msra.mxu0 0.0
    %1516 = vmatpush.msra.mxu0 0.0
    %1517 = vmatpush.msra.mxu0 0.0
    %1518 = vmatpush.msra.mxu0 0.0
    %1519 = vmatpush.msra.mxu0 %v1382
    %1520 = vmatpush.msra.mxu0 %v1381
    %1521 = vmatmul.f32.gmra.mxu0 %v773
    %v1522 = vpop.f32.mrf.mxu0
    %v1523 = vadd.f32 %v1383, %v1522
    %1524 = vdwg.mxu0
    %v1525 = vsel %vm515, %v1523, 0.0
    %1526 = vadd.xlane.f32.xlu0 %v1525
    %v1527 = vpop.xlane.xlu0 %1526
    %v1528 = vmul.f32 %v1527, %v650
    %v1529 = vsub.f32 %v1523, %v1528
    %v1530 = vmul.f32 %v1529, %v1529
    %v1531 = vsel %vm515, %v1530, 0.0
    %1532 = vadd.xlane.f32.xlu0 %v1531
    %v1533 = vpop.xlane.xlu0 %1532
    %v1534 = vmul.f32 %v1533, %v650
    %v1535 = vadd.f32 %v1534, 1e-05
    %v1536 = vrsqrt.pop %v1535
    %v1537 = vmul.f32 %v1536, %v1535
    %v1538 = vmul.f32 %v1537, %v1536
    %v1539 = vmul.f32 0.5, %v1538
    %v1540 = vsub.f32 1.5, %v1539
    %v1541 = vmul.f32 %v1536, %v1540
    %vm1542 = vweird.f32 %v1535
    %vm1543 = vweird.f32 %v1536
    %vm1544 = vmor %vm1542, %vm1543
    %v1545 = vsel %vm1544, %v1536, %v1541
    %v1546 = vmul.f32 %v1529, %v1545
    %v1547 = vmul.f32 %v1546, %v1426
    %v1548 = vadd.f32 %v1547, %v1428
    %v1549 = vmax.f32 %v1548, 0.0
    %v1551 = vsel %vm457, %v1549, 0
    %1553 = vmatpush.msra.mxu0 0.0
    %1554 = vmatpush.msra.mxu0 0.0
    %1555 = vmatpush.msra.mxu0 0.0
    %1556 = vmatpush.msra.mxu0 0.0
    %1557 = vmatpush.msra.mxu0 0.0
    %1558 = vmatpush.msra.mxu0 0.0
    %1559 = vmatpush.msra.mxu0 0.0
    %1560 = vmatpush.msra.mxu0 0.0
    %1561 = vmatpush.msra.mxu0 0.0
    %1562 = vmatpush.msra.mxu0 0.0
    %1563 = vmatpush.msra.mxu0 0.0
    %1564 = vmatpush.msra.mxu0 0.0
    %1565 = vmatpush.msra.mxu0 0.0
    %1566 = vmatpush.msra.mxu0 0.0
    %1567 = vmatpush.msra.mxu0 0.0
    %1568 = vmatpush.msra.mxu0 %v1438
    %1569 = vmatmul.f32.gmra.mxu0 %v1551
    %v1570 = vpop.f32.mrf.mxu0
    %v1571 = vadd.f32 %v1433, %v1570
    %1572 = vdwg.mxu0
    %v1573 = vsel %vm703, %v1571, 0.0
    %1574 = vadd.xlane.f32.xlu0 %v1573
    %v1575 = vpop.xlane.xlu0 %1574
    %v1576 = vmul.f32 %v1575, %v713
    %v1577 = vsub.f32 %v1571, %v1576
    %v1578 = vmul.f32 %v1577, %v1577
    %v1579 = vsel %vm703, %v1578, 0.0
    %1580 = vadd.xlane.f32.xlu0 %v1579
    %v1581 = vpop.xlane.xlu0 %1580
    %v1582 = vmul.f32 %v1581, %v713
    %v1583 = vadd.f32 %v1582, 1e-05
    %v1584 = vrsqrt.pop %v1583
    %v1585 = vmul.f32 %v1584, %v1583
    %v1586 = vmul.f32 %v1585, %v1584
    %v1587 = vmul.f32 0.5, %v1586
    %v1588 = vsub.f32 1.5, %v1587
    %v1589 = vmul.f32 %v1584, %v1588
    %vm1590 = vweird.f32 %v1583
    %vm1591 = vweird.f32 %v1584
    %vm1592 = vmor %vm1590, %vm1591
    %v1593 = vsel %vm1592, %v1584, %v1589
    %v1594 = vmul.f32 %v1577, %v1593
    %v1595 = vmul.f32 %v1594, %v1482
    %v1596 = vadd.f32 %v1595, %v1484
    %v1597 = vxor.u32 %v1596, 2147483648
    %v1598 = vmul.f32 %v1597, 1.442695
    %v1599 = vpow.pop %v1598
    %v1600 = vadd.f32 %v1599, 1.0
    %v1601 = vrcp.pop %v1600
    %v1602 = vmul.f32 %v1600, %v1601
    %v1603 = vsub.f32 1.0, %v1602
    %v1604 = vmul.f32 %v1601, %v1603
    %v1605 = vadd.f32 %v1601, %v1604
    %vm1606 = vweird.f32 %v1600
    %vm1607 = vweird.f32 %v1601
    %vm1608 = vmor %vm1606, %vm1607
    %v1609 = vsel %vm1608, %v1601, %v1605
    %v1610 = vand.u32 2147483647, %v1600
    %vm1611 = vcmp.eq.f32.partialorder %v1610, 8.507059e+37
    %v1612 = vand.u32 %v1600, 2147483648
    %v1613 = vor.u32 1.1754944e-38, %v1612
    %v1614 = vsel %vm1611, %v1613, %v1609
    %v1615 = vmul.f32 1.0, %v1614
    %v1616 = vadd.f32 %v1504, %v1615
    %1617 = vset.pattern.permute.xlu0 3
    %1618 = vperm.xlu0 %1617, %v611
    %v1619 = vpop.permute.xlu0 %1618
    %v1621 = vmul.f32 %v1616, %v1619
    %v1622 = vadd.f32 %v1379, %v1621
    %v1623 = vxor.u32 %v1622, 2147483648
    %v1624 = vmul.f32 %v1623, 1.442695
    %v1625 = vpow.pop %v1624
    %v1626 = vadd.f32 %v1625, 1.0
    %v1627 = vrcp.pop %v1626
    %v1628 = vmul.f32 %v1626, %v1627
    %v1629 = vsub.f32 1.0, %v1628
    %v1630 = vmul.f32 %v1627, %v1629
    %v1631 = vadd.f32 %v1627, %v1630
    %vm1632 = vweird.f32 %v1626
    %vm1633 = vweird.f32 %v1627
    %vm1634 = vmor %vm1632, %vm1633
    %v1635 = vsel %vm1634, %v1627, %v1631
    %v1636 = vand.u32 2147483647, %v1626
    %vm1637 = vcmp.eq.f32.partialorder %v1636, 8.507059e+37
    %v1638 = vand.u32 %v1626, 2147483648
    %v1639 = vor.u32 1.1754944e-38, %v1638
    %v1640 = vsel %vm1637, %v1639, %v1635
    %v1641 = vmul.f32 1.0, %v1640
    %v1642 = vadd.f32 %v1641, 1.0
    %v1643 = vperm.slane %v1642, 0
    %v1644 = vlaneseq
    %v1645 = vshrl.u32 %v1644, 7
    %1647 = vset.pattern.permute.xlu0 %v1645
    %1648 = vperm.xlu0 %1647, %v1643
    %v1649 = vpop.permute.xlu0 %1648
    %v1650 = vlaneseq
    %v1651 = vshrl.u32 %v1650, 7
    %v1652 = vadd.s32 %v1651, 8
    %1653 = vset.pattern.permute.xlu0 %v1652
    %1654 = vperm.xlu0 %1653, %v1643
    %v1655 = vpop.permute.xlu0 %1654
    %v1656 = vperm.slane %v1642, 1
    %v1657 = vlaneseq
    %v1658 = vshrl.u32 %v1657, 7
    %1660 = vset.pattern.permute.xlu0 %v1658
    %1661 = vperm.xlu0 %1660, %v1656
    %v1662 = vpop.permute.xlu0 %1661
    %v1663 = vlaneseq
    %v1664 = vshrl.u32 %v1663, 7
    %v1665 = vadd.s32 %v1664, 8
    %1666 = vset.pattern.permute.xlu0 %v1665
    %1667 = vperm.xlu0 %1666, %v1656
    %v1668 = vpop.permute.xlu0 %1667
    %v1669 = vperm.slane %v1642, 2
    %v1670 = vlaneseq
    %v1671 = vshrl.u32 %v1670, 7
    %1673 = vset.pattern.permute.xlu0 %v1671
    %1674 = vperm.xlu0 %1673, %v1669
    %v1675 = vpop.permute.xlu0 %1674
    %v1676 = vlaneseq
    %v1677 = vshrl.u32 %v1676, 7
    %v1678 = vadd.s32 %v1677, 8
    %1679 = vset.pattern.permute.xlu0 %v1678
    %1680 = vperm.xlu0 %1679, %v1669
    %v1681 = vpop.permute.xlu0 %1680
    %v1682 = vmul.f32 %v70, %v1649
    %v1683 = vmul.f32 %v71, %v1649
    %v1684 = vmul.f32 %v72, %v1655
    %v1685 = vmul.f32 %v73, %v1655
    %v1686 = vmul.f32 %v74, %v1662
    %v1687 = vmul.f32 %v75, %v1662
    %v1688 = vmul.f32 %v76, %v1668
    %v1689 = vmul.f32 %v77, %v1668
    %v1690 = vmul.f32 %v78, %v1675
    %v1691 = vmul.f32 %v79, %v1675
    %v1692 = vmul.f32 %v80, %v1681
    %v1693 = vmul.f32 %v81, %v1681
    %1694 = vst [vmem:[#allocation5] sm:$0xff] %v1682
    %1695 = vst.msk [vmem:[#allocation5 + $0x8] sm:$0xff] %vm82, %v1683
    %1696 = vst [vmem:[#allocation5 + $0x10] sm:$0xff] %v1684
    %1697 = vst.msk [vmem:[#allocation5 + $0x18] sm:$0xff] %vm82, %v1685
    %1698 = vst [vmem:[#allocation5 + $0x20] sm:$0xff] %v1686
    %1699 = vst.msk [vmem:[#allocation5 + $0x28] sm:$0xff] %vm82, %v1687
    %1700 = vst [vmem:[#allocation5 + $0x30] sm:$0xff] %v1688
    %1701 = vst.msk [vmem:[#allocation5 + $0x38] sm:$0xff] %vm82, %v1689
    %1702 = vst [vmem:[#allocation5 + $0x40] sm:$0xff] %v1690
    %1703 = vst.msk [vmem:[#allocation5 + $0x48] sm:$0xff] %vm82, %v1691
    %1704 = vst [vmem:[#allocation5 + $0x50] sm:$0xff] %v1692
    %1705 = vst.msk [vmem:[#allocation5 + $0x58] sm:$0xff] %vm82, %v1693
    // Predicated region
    $region70: #{tpu_custom_call.1} parent=1 // pred_check
      _
    $region71: #{tpu_custom_call.1} parent=1 // pred_check_branch
      %1707 = sbr.rel (0) target = $region73
    $region72: #{tpu_custom_call.1} parent=1 // pred_region
      %1709 = vsyncadd [#allocation4], 0
      %s1710 = sshll.u32 [#allocation5], 4
      %s1711 = int_to_ptr.vmem [resolvable:$true] %s1710
      %s1712 = sshll.u32 %s16, 4
      %s1713 = int_to_ptr.hbm [resolvable:$true] %s1712
      %1718 = dma.vmem_to_hbm [thread:$0]  %s1711, 1536, %s1713, [#allocation4], 256, 256, 16
    $region73: #{tpu_custom_call.1} parent=1 // pred_fallthru
      _
    // Predicated region
    $region74: #{tpu_custom_call.1} parent=1 // pred_check
      _
    $region75: #{tpu_custom_call.1} parent=1 // pred_check_branch
      %1720 = sbr.rel (0) target = $region77
    $region76: #{tpu_custom_call.1} parent=1 // pred_region
      %1722 = dma.done [#allocation4], 1536
    $region77: #{tpu_custom_call.1} parent=1 // pred_fallthru
      _
    %1723 = vsyncpa [#allocation3], 1
    %1724 = vsyncpa [#allocation4], 1

</llo_original>
